<compile_context>
chip_gen: v6e
topology: v6e:2x2x1
jax: 0.10.0
libtpu: 0.0.40
codegen_flags: <defaults>
</compile_context>

<pallas_src>
import jax
import jax.numpy as jnp
from jax import lax
from jax.experimental import pallas as pl
from jax.experimental.pallas import tpu as pltpu


def _round_up(v, m):
    return ((v + m - 1) // m) * m


def _vmem_budget_bytes():
    """~70% of physical VMEM (queried when available; conservative v7x fallback)."""
    try:
        return int(pltpu.get_tpu_info().vmem_capacity_bytes * 0.70)
    except Exception:
        return 44 * 1024 * 1024


def _block_vmem_bytes(nb, H, W, Wp, Cin, Cout, in_itemsize, out_itemsize):
    """Rough per-grid-step VMEM footprint (double-buffered blocks + scratch + slack)."""
    rows = nb * H * Wp
    r1y = rows - 3 * Wp + W - 2
    y1_alloc = _round_up(max(r1y, 8), 8)
    b = 0
    b += 2 * rows * (3 * Cin) * in_itemsize            # input block (im2col), double buffered
    b += 2 * rows * Cout * out_itemsize                # output block, double buffered
    b += y1_alloc * Cout * in_itemsize                 # conv1 activation scratch
    b += 2 * (9 * Cin * Cout + 9 * Cout * Cout) * in_itemsize + 2 * 2 * Cout * 4  # weights/bias
    b += 2 << 20                                       # slack for band values / accumulators
    return b


def _pick_nb(N, fits):
    """Largest divisor of N that fits the VMEM budget, keeping >=2 grid steps when N >= 2."""
    divs = [d for d in range(1, N + 1) if N % d == 0]
    ok = [d for d in divs if fits(d)]
    if not ok:
        return 1
    nb = max(ok)
    if N >= 2 and N // nb < 2:
        smaller = [d for d in ok if N // d >= 2]
        if smaller:
            nb = max(smaller)
    return nb


def _build_kernel(*, Wp, Cout, bm, n1_full, t1, n2_full, t2):
    """Fused (3x3 VALID conv + ReLU) x 2 over one batch block, in flat-plane coordinates.

    x_ref : (rows, 3*Cin)   bf16, width-im2col'd flat plane of `nb` images (row stride Wp)
    w1_ref: (3, 3*Cin, Cout)  w2_ref: (3, 3*Cout, Cout)   (kw folded into the contraction)
    b*_ref: (1, Cout) f32
    o_ref : (rows, Cout)    flat output slab; the wrapper un-flattens and crops the VALID region
    y1_ref: VMEM scratch holding the conv1 activation (bf16) -- it never touches HBM
    """

    def kernel(x_ref, w1_ref, b1_ref, w2_ref, b2_ref, o_ref, y1_ref):
        w1 = [w1_ref[k] for k in range(3)]
        w2 = [w2_ref[k] for k in range(3)]
        b1 = b1_ref[...].astype(jnp.float32)
        b2 = b2_ref[...].astype(jnp.float32)

        def conv1_band(base, sz):
            # 3 aligned loads, 3 MXU matmuls (K = 3*Cin), band accumulator stays in vregs.
            acc = jnp.zeros((sz, Cout), jnp.float32)
            for kh in range(3):
                patch = x_ref[pl.ds(base + kh * Wp, sz), :]
                acc = acc + jnp.dot(patch, w1[kh], preferred_element_type=jnp.float32)
            y1_ref[pl.ds(base, sz), :] = jnp.maximum(acc + b1, 0.0).astype(y1_ref.dtype)

        def conv2_band(base, sz):
            acc = jnp.zeros((sz, Cout), jnp.float32)
            for kh in range(3):
                # Aligned load (+2-row width halo), then in-register width im2col -> (sz, 3*Cout).
                slab = y1_ref[pl.ds(base + kh * Wp, sz + 2), :]
                patch = jnp.concatenate(
                    [slab[0:sz], slab[1:sz + 1], slab[2:sz + 2]], axis=-1)
                acc = acc + jnp.dot(patch, w2[kh], preferred_element_type=jnp.float32)
            o_ref[pl.ds(base, sz), :] = jnp.maximum(acc + b2, 0.0).astype(o_ref.dtype)

        # ---- conv1 + ReLU (banded) ----
        if n1_full > 0:
            def body1(b, carry):
                conv1_band(pl.multiple_of(b * bm, 8), bm)
                return carry
            lax.fori_loop(0, n1_full, body1, 0)
        if t1 > 0:
            conv1_band(n1_full * bm, t1)

        # ---- conv2 + ReLU (banded), reading the bf16 conv1 activation straight out of VMEM ----
        if n2_full > 0:
            def body2(b, carry):
                conv2_band(pl.multiple_of(b * bm, 8), bm)
                return carry
            lax.fori_loop(0, n2_full, body2, 0)
        if t2 > 0:
            conv2_band(n2_full * bm, t2)

    return kernel


def unet_in_conv_nhwc(x_nhwc, params, *, compute_dtype=jnp.bfloat16, band_rows=128):
    """Fused UNetInConv forward on NHWC input; returns NHWC output (H-4, W-4)."""
    N, H, W, Cin = x_nhwc.shape
    assert H >= 5 and W >= 5, (H, W)
    Cout = params["w1"].shape[-1]
    Wp = _round_up(W, 8)
    Lp = H * Wp
    out_dtype = x_nhwc.dtype

    # ---- width im2col on the XLA side (contiguous pad / reshape / concat, cheap) ----
    if Wp != W:
        x_nhwc = jnp.pad(x_nhwc, ((0, 0), (0, 0), (0, Wp - W), (0, 0)))
    x_flat = x_nhwc.reshape(N * Lp, Cin)
    xz = jnp.concatenate([x_flat, jnp.zeros((2, Cin), x_flat.dtype)], axis=0)
    x_cat = jnp.concatenate(
        [xz[0:N * Lp], xz[1:N * Lp + 1], xz[2:N * Lp + 2]], axis=-1).astype(compute_dtype)

    w1c = params["w1"].reshape(3, 3 * Cin, Cout).astype(compute_dtype)   # (kh, kw*Cin, Cout)
    w2c = params["w2"].reshape(3, 3 * Cout, Cout).astype(compute_dtype)  # (kh, kw*Cout, Cout)
    b1 = params["b1"].reshape(1, Cout).astype(jnp.float32)
    b2 = params["b2"].reshape(1, Cout).astype(jnp.float32)

    # ---- batch-block size from an explicit VMEM byte budget ----
    in_isz = jnp.dtype(compute_dtype).itemsize
    out_isz = jnp.dtype(out_dtype).itemsize
    budget = _vmem_budget_bytes()
    fits = lambda nb: _block_vmem_bytes(nb, H, W, Wp, Cin, Cout, in_isz, out_isz) <= budget
    nb = _pick_nb(N, fits)
    rows = nb * Lp

    # ---- static extents (flat-row coordinates within one batch block) ----
    i_max = rows - 5 * Wp + W - 5          # last flat row kept by the VALID crop
    r2 = i_max + 1                         # conv2 rows to compute
    r1y = r2 + 2 * Wp + 2                  # conv1 rows conv2 reads (incl. the +2 width halo)
    y1_alloc = _round_up(r1y, 8)
    bm = max(8, _round_up(band_rows, 8))   # band rows for in-register accumulation
    n1_full, t1 = r1y // bm, r1y % bm
    n2_full, t2 = r2 // bm, r2 % bm

    need = _block_vmem_bytes(nb, H, W, Wp, Cin, Cout, in_isz, out_isz)
    vmem_limit = int(min(max(2 * need, 32 << 20), max(budget, need)))

    kernel = _build_kernel(Wp=Wp, Cout=Cout, bm=bm,
                           n1_full=n1_full, t1=t1, n2_full=n2_full, t2=t2)

    out_flat = pl.pallas_call(
        kernel,
        out_shape=jax.ShapeDtypeStruct((N * Lp, Cout), out_dtype),
        grid_spec=pltpu.PrefetchScalarGridSpec(
            num_scalar_prefetch=0,
            grid=(N // nb,),
            in_specs=[
                pl.BlockSpec((rows, 3 * Cin), lambda i: (i, 0)),
                pl.BlockSpec((3, 3 * Cin, Cout), lambda i: (0, 0, 0)),
                pl.BlockSpec((1, Cout), lambda i: (0, 0)),
                pl.BlockSpec((3, 3 * Cout, Cout), lambda i: (0, 0, 0)),
                pl.BlockSpec((1, Cout), lambda i: (0, 0)),
            ],
            out_specs=pl.BlockSpec((rows, Cout), lambda i: (i, 0)),
            scratch_shapes=[pltpu.VMEM((y1_alloc, Cout), compute_dtype)],
        ),
        compiler_params=pltpu.CompilerParams(
            dimension_semantics=("parallel",),
            vmem_limit_bytes=vmem_limit),
    )(x_cat, w1c, b1, w2c, b2)

    # Un-flatten + VALID crop on the XLA side (the kernel's store stays contiguous / whole-tile).
    out = out_flat.reshape(N, H, Wp, Cout)[:, :H - 4, :W - 4, :]
    return out


def unet_in_conv(x_nchw, params, **kw):
    """PyTorch-parity entry point (NCHW in / NCHW out).

    NOTE: keep activations NHWC across the surrounding model when possible; these two
    transposes exist only to match the nn.Module NCHW interface exactly.
    """
    x = jnp.transpose(x_nchw, (0, 2, 3, 1))
    y = unet_in_conv_nhwc(x, params, **kw)
    return jnp.transpose(y, (0, 3, 1, 2))


def ref_forward(x_nchw, params, compute_dtype=jnp.float32):
    """Pure-JAX reference of the PyTorch forward (NCHW, VALID convs).

    With compute_dtype=bf16 it mimics the kernel's numerics (bf16 MXU operands, f32 accumulation,
    bf16 intermediate activation); with f32 it is the exact nn.Module forward.
    """
    def conv(x, w_hwio, b):
        w_oihw = jnp.transpose(w_hwio, (3, 2, 0, 1)).astype(compute_dtype)
        y = lax.conv_general_dilated(
            x.astype(compute_dtype), w_oihw, window_strides=(1, 1), padding="VALID",
            dimension_numbers=("NCHW", "OIHW", "NCHW"),
            preferred_element_type=jnp.float32)
        return jax.nn.relu(y + b.reshape(1, -1, 1, 1).astype(jnp.float32))

    y = conv(x_nchw, params["w1"], params["b1"])
    return conv(y, params["w2"], params["b2"])


def init_params(key, in_channels, out_channels):
    # Deterministic synthetic init (weights stored directly in HWIO = (3, 3, in, out)).
    k1, k2, k3, k4 = jax.random.split(key, 4)
    s1 = 1.0 / jnp.sqrt(in_channels * 9.0)
    s2 = 1.0 / jnp.sqrt(out_channels * 9.0)
    return {
        "w1": jax.random.normal(k1, (3, 3, in_channels, out_channels), jnp.float32) * s1,
        "b1": jax.random.normal(k2, (out_channels,), jnp.float32) * s1,
        "w2": jax.random.normal(k3, (3, 3, out_channels, out_channels), jnp.float32) * s2,
        "b2": jax.random.normal(k4, (out_channels,), jnp.float32) * s2,
    }


if __name__ == "__main__":
    N, C_IN, C_OUT, H, W = 2, 4, 8, 16, 16

    key = jax.random.PRNGKey(0)
    kx, kp = jax.random.split(key)
    x = jax.random.normal(kx, (N, C_IN, H, W), jnp.float32)
    params = init_params(kp, C_IN, C_OUT)

    out = jax.block_until_ready(unet_in_conv(x, params))

    # Shape check: two VALID 3x3 convs shrink each spatial dim by 4.
    assert out.shape == (N, C_OUT, H - 4, W - 4), out.shape

    # Numerical check. The kernel uses bf16 MXU operands (f32 accumulation), so compare tightly
    # against a bf16-mimicking reference and loosely against the exact f32 reference.
    ref_bf16 = jax.block_until_ready(ref_forward(x, params, jnp.bfloat16))
    ref_f32 = jax.block_until_ready(ref_forward(x, params, jnp.float32))
    err_bf16 = float(jnp.max(jnp.abs(out - ref_bf16)))
    err_f32 = float(jnp.max(jnp.abs(out - ref_f32)))
    assert err_bf16 < 3e-3, f"max abs error vs bf16 reference {err_bf16}"
    assert err_f32 < 1e-1, f"max abs error vs f32 reference {err_f32}"

    print("KERNEL_OK")
</pallas_src>

<mosaic_0001>
module attributes {stable_mosaic.version = 11 : i64} {
  func.func @kernel(%arg0: i32, %arg1: memref<256x12xbf16, #tpu.memory_space<vmem>>, %arg2: memref<3x12x8xbf16, #tpu.memory_space<vmem>>, %arg3: memref<1x8xf32, #tpu.memory_space<vmem>>, %arg4: memref<3x24x8xbf16, #tpu.memory_space<vmem>>, %arg5: memref<1x8xf32, #tpu.memory_space<vmem>>, %arg6: memref<256x8xf32, #tpu.memory_space<vmem>>, %arg7: memref<224x8xbf16, #tpu.memory_space<vmem>>) attributes {dimension_semantics = [#tpu.dimension_semantics<parallel>], iteration_bounds = array<i64: 2>, scalar_prefetch = 0 : i64, scratch_operands = 1 : i64, tpu.core_type = #tpu.core_type<tc>, window_params = [{transform_indices = @transform_0, window_bounds = array<i64: 256, 12>}, {pipeline_mode = #tpu.pipeline_mode<synchronous>, transform_indices = @transform_1, window_bounds = array<i64: 3, 12, 8>}, {pipeline_mode = #tpu.pipeline_mode<synchronous>, transform_indices = @transform_2, window_bounds = array<i64: 1, 8>}, {pipeline_mode = #tpu.pipeline_mode<synchronous>, transform_indices = @transform_3, window_bounds = array<i64: 3, 24, 8>}, {pipeline_mode = #tpu.pipeline_mode<synchronous>, transform_indices = @transform_4, window_bounds = array<i64: 1, 8>}, {transform_indices = @transform_5, window_bounds = array<i64: 256, 8>}]} {
    %c0 = arith.constant 0 : index
    %c0_0 = arith.constant 0 : index
    %c0_1 = arith.constant 0 : index
    %0 = vector.load %arg2[%c0, %c0_0, %c0_1] : memref<3x12x8xbf16, #tpu.memory_space<vmem>>, vector<1x12x8xbf16>
    %1 = vector.shape_cast %0 : vector<1x12x8xbf16> to vector<12x8xbf16>
    %c1 = arith.constant 1 : index
    %c0_2 = arith.constant 0 : index
    %c0_3 = arith.constant 0 : index
    %2 = vector.load %arg2[%c1, %c0_2, %c0_3] : memref<3x12x8xbf16, #tpu.memory_space<vmem>>, vector<1x12x8xbf16>
    %3 = vector.shape_cast %2 : vector<1x12x8xbf16> to vector<12x8xbf16>
    %c2 = arith.constant 2 : index
    %c0_4 = arith.constant 0 : index
    %c0_5 = arith.constant 0 : index
    %4 = vector.load %arg2[%c2, %c0_4, %c0_5] : memref<3x12x8xbf16, #tpu.memory_space<vmem>>, vector<1x12x8xbf16>
    %5 = vector.shape_cast %4 : vector<1x12x8xbf16> to vector<12x8xbf16>
    %c0_6 = arith.constant 0 : index
    %c0_7 = arith.constant 0 : index
    %c0_8 = arith.constant 0 : index
    %6 = vector.load %arg4[%c0_6, %c0_7, %c0_8] : memref<3x24x8xbf16, #tpu.memory_space<vmem>>, vector<1x24x8xbf16>
    %7 = vector.shape_cast %6 : vector<1x24x8xbf16> to vector<24x8xbf16>
    %c1_9 = arith.constant 1 : index
    %c0_10 = arith.constant 0 : index
    %c0_11 = arith.constant 0 : index
    %8 = vector.load %arg4[%c1_9, %c0_10, %c0_11] : memref<3x24x8xbf16, #tpu.memory_space<vmem>>, vector<1x24x8xbf16>
    %9 = vector.shape_cast %8 : vector<1x24x8xbf16> to vector<24x8xbf16>
    %c2_12 = arith.constant 2 : index
    %c0_13 = arith.constant 0 : index
    %c0_14 = arith.constant 0 : index
    %10 = vector.load %arg4[%c2_12, %c0_13, %c0_14] : memref<3x24x8xbf16, #tpu.memory_space<vmem>>, vector<1x24x8xbf16>
    %11 = vector.shape_cast %10 : vector<1x24x8xbf16> to vector<24x8xbf16>
    %c0_15 = arith.constant 0 : index
    %c0_16 = arith.constant 0 : index
    %12 = vector.load %arg3[%c0_15, %c0_16] : memref<1x8xf32, #tpu.memory_space<vmem>>, vector<1x8xf32>
    %c0_17 = arith.constant 0 : index
    %c0_18 = arith.constant 0 : index
    %13 = vector.load %arg5[%c0_17, %c0_18] : memref<1x8xf32, #tpu.memory_space<vmem>>, vector<1x8xf32>
    %c0_i32 = arith.constant 0 : i32
    %c128_i32 = arith.constant 128 : i32
    %14 = arith.muli %c0_i32, %c128_i32 : i32
    %15 = tpu.assume_multiple %14, 8 : i32
    %cst = arith.constant 0.000000e+00 : f32
    %16 = vector.broadcast %cst : f32 to vector<128x8xf32>
    %c0_i32_19 = arith.constant 0 : i32
    %17 = arith.addi %15, %c0_i32_19 : i32
    %18 = arith.index_cast %17 : i32 to index
    %c0_20 = arith.constant 0 : index
    %19 = vector.load %arg1[%18, %c0_20] : memref<256x12xbf16, #tpu.memory_space<vmem>>, vector<128x12xbf16>
    %cst_21 = arith.constant dense<0.000000e+00> : vector<128x8xf32>
    %20 = tpu.matmul %19, %1, %cst_21 {dimension_numbers = #tpu.dot_dimension_numbers<[1], [0], [0], [1], [0, 0, 1, 1], [], []>} : vector<128x12xbf16>, vector<12x8xbf16>, vector<128x8xf32> -> vector<128x8xf32>
    %21 = arith.addf %16, %20 : vector<128x8xf32>
    %c16_i32 = arith.constant 16 : i32
    %22 = arith.addi %15, %c16_i32 : i32
    %23 = arith.index_cast %22 : i32 to index
    %c0_22 = arith.constant 0 : index
    %24 = vector.load %arg1[%23, %c0_22] : memref<256x12xbf16, #tpu.memory_space<vmem>>, vector<128x12xbf16>
    %cst_23 = arith.constant dense<0.000000e+00> : vector<128x8xf32>
    %25 = tpu.matmul %24, %3, %cst_23 {dimension_numbers = #tpu.dot_dimension_numbers<[1], [0], [0], [1], [0, 0, 1, 1], [], []>} : vector<128x12xbf16>, vector<12x8xbf16>, vector<128x8xf32> -> vector<128x8xf32>
    %26 = arith.addf %21, %25 : vector<128x8xf32>
    %c32_i32 = arith.constant 32 : i32
    %27 = arith.addi %15, %c32_i32 : i32
    %28 = arith.index_cast %27 : i32 to index
    %c0_24 = arith.constant 0 : index
    %29 = vector.load %arg1[%28, %c0_24] : memref<256x12xbf16, #tpu.memory_space<vmem>>, vector<128x12xbf16>
    %cst_25 = arith.constant dense<0.000000e+00> : vector<128x8xf32>
    %30 = tpu.matmul %29, %5, %cst_25 {dimension_numbers = #tpu.dot_dimension_numbers<[1], [0], [0], [1], [0, 0, 1, 1], [], []>} : vector<128x12xbf16>, vector<12x8xbf16>, vector<128x8xf32> -> vector<128x8xf32>
    %31 = arith.addf %26, %30 : vector<128x8xf32>
    %32 = vector.broadcast %12 : vector<1x8xf32> to vector<128x8xf32>
    %33 = arith.addf %31, %32 : vector<128x8xf32>
    %cst_26 = arith.constant 0.000000e+00 : f32
    %34 = vector.broadcast %cst_26 : f32 to vector<128x8xf32>
    %35 = arith.maximumf %33, %34 : vector<128x8xf32>
    %36 = arith.truncf %35 : vector<128x8xf32> to vector<128x8xbf16>
    %37 = arith.index_cast %15 : i32 to index
    %c0_27 = arith.constant 0 : index
    %38 = vector.load %arg7[%37, %c0_27] : memref<224x8xbf16, #tpu.memory_space<vmem>>, vector<128x8xbf16>
    tpu.vector_store %arg7[%37, %c0_27], %36 {strides = array<i32>} : memref<224x8xbf16, #tpu.memory_space<vmem>>, vector<128x8xbf16>,
    %c1_i32 = arith.constant 1 : i32
    %cst_28 = arith.constant 0.000000e+00 : f32
    %39 = vector.broadcast %cst_28 : f32 to vector<94x8xf32>
    %c128 = arith.constant 128 : index
    %c0_29 = arith.constant 0 : index
    %40 = vector.load %arg1[%c128, %c0_29] : memref<256x12xbf16, #tpu.memory_space<vmem>>, vector<94x12xbf16>
    %cst_30 = arith.constant dense<0.000000e+00> : vector<94x8xf32>
    %41 = tpu.matmul %40, %1, %cst_30 {dimension_numbers = #tpu.dot_dimension_numbers<[1], [0], [0], [1], [0, 0, 1, 1], [], []>} : vector<94x12xbf16>, vector<12x8xbf16>, vector<94x8xf32> -> vector<94x8xf32>
    %42 = arith.addf %39, %41 : vector<94x8xf32>
    %c144 = arith.constant 144 : index
    %c0_31 = arith.constant 0 : index
    %43 = vector.load %arg1[%c144, %c0_31] : memref<256x12xbf16, #tpu.memory_space<vmem>>, vector<94x12xbf16>
    %cst_32 = arith.constant dense<0.000000e+00> : vector<94x8xf32>
    %44 = tpu.matmul %43, %3, %cst_32 {dimension_numbers = #tpu.dot_dimension_numbers<[1], [0], [0], [1], [0, 0, 1, 1], [], []>} : vector<94x12xbf16>, vector<12x8xbf16>, vector<94x8xf32> -> vector<94x8xf32>
    %45 = arith.addf %42, %44 : vector<94x8xf32>
    %c160 = arith.constant 160 : index
    %c0_33 = arith.constant 0 : index
    %46 = vector.load %arg1[%c160, %c0_33] : memref<256x12xbf16, #tpu.memory_space<vmem>>, vector<94x12xbf16>
    %cst_34 = arith.constant dense<0.000000e+00> : vector<94x8xf32>
    %47 = tpu.matmul %46, %5, %cst_34 {dimension_numbers = #tpu.dot_dimension_numbers<[1], [0], [0], [1], [0, 0, 1, 1], [], []>} : vector<94x12xbf16>, vector<12x8xbf16>, vector<94x8xf32> -> vector<94x8xf32>
    %48 = arith.addf %45, %47 : vector<94x8xf32>
    %49 = vector.broadcast %12 : vector<1x8xf32> to vector<94x8xf32>
    %50 = arith.addf %48, %49 : vector<94x8xf32>
    %cst_35 = arith.constant 0.000000e+00 : f32
    %51 = vector.broadcast %cst_35 : f32 to vector<94x8xf32>
    %52 = arith.maximumf %50, %51 : vector<94x8xf32>
    %53 = arith.truncf %52 : vector<94x8xf32> to vector<94x8xbf16>
    %c128_36 = arith.constant 128 : index
    %c0_37 = arith.constant 0 : index
    %54 = vector.load %arg7[%c128_36, %c0_37] : memref<224x8xbf16, #tpu.memory_space<vmem>>, vector<94x8xbf16>
    tpu.vector_store %arg7[%c128_36, %c0_37], %53 {strides = array<i32>} : memref<224x8xbf16, #tpu.memory_space<vmem>>, vector<94x8xbf16>,
    %c0_i32_38 = arith.constant 0 : i32
    %c128_i32_39 = arith.constant 128 : i32
    %55 = arith.muli %c0_i32_38, %c128_i32_39 : i32
    %56 = tpu.assume_multiple %55, 8 : i32
    %cst_40 = arith.constant 0.000000e+00 : f32
    %57 = vector.broadcast %cst_40 : f32 to vector<128x8xf32>
    %c0_i32_41 = arith.constant 0 : i32
    %58 = arith.addi %56, %c0_i32_41 : i32
    %59 = arith.index_cast %58 : i32 to index
    %c0_42 = arith.constant 0 : index
    %60 = vector.load %arg7[%59, %c0_42] : memref<224x8xbf16, #tpu.memory_space<vmem>>, vector<130x8xbf16>
    %61 = vector.extract_strided_slice %60 {offsets = [0, 0], sizes = [128, 8], strides = [1, 1]} : vector<130x8xbf16> to vector<128x8xbf16>
    %62 = vector.extract_strided_slice %60 {offsets = [1, 0], sizes = [128, 8], strides = [1, 1]} : vector<130x8xbf16> to vector<128x8xbf16>
    %63 = vector.extract_strided_slice %60 {offsets = [2, 0], sizes = [128, 8], strides = [1, 1]} : vector<130x8xbf16> to vector<128x8xbf16>
    %64 = tpu.concatenate %61, %62, %63 in 1 : vector<128x8xbf16>, vector<128x8xbf16>, vector<128x8xbf16> -> vector<128x24xbf16>
    %cst_43 = arith.constant dense<0.000000e+00> : vector<128x8xf32>
    %65 = tpu.matmul %64, %7, %cst_43 {dimension_numbers = #tpu.dot_dimension_numbers<[1], [0], [0], [1], [0, 0, 1, 1], [], []>} : vector<128x24xbf16>, vector<24x8xbf16>, vector<128x8xf32> -> vector<128x8xf32>
    %66 = arith.addf %57, %65 : vector<128x8xf32>
    %c16_i32_44 = arith.constant 16 : i32
    %67 = arith.addi %56, %c16_i32_44 : i32
    %68 = arith.index_cast %67 : i32 to index
    %c0_45 = arith.constant 0 : index
    %69 = vector.load %arg7[%68, %c0_45] : memref<224x8xbf16, #tpu.memory_space<vmem>>, vector<130x8xbf16>
    %70 = vector.extract_strided_slice %69 {offsets = [0, 0], sizes = [128, 8], strides = [1, 1]} : vector<130x8xbf16> to vector<128x8xbf16>
    %71 = vector.extract_strided_slice %69 {offsets = [1, 0], sizes = [128, 8], strides = [1, 1]} : vector<130x8xbf16> to vector<128x8xbf16>
    %72 = vector.extract_strided_slice %69 {offsets = [2, 0], sizes = [128, 8], strides = [1, 1]} : vector<130x8xbf16> to vector<128x8xbf16>
    %73 = tpu.concatenate %70, %71, %72 in 1 : vector<128x8xbf16>, vector<128x8xbf16>, vector<128x8xbf16> -> vector<128x24xbf16>
    %cst_46 = arith.constant dense<0.000000e+00> : vector<128x8xf32>
    %74 = tpu.matmul %73, %9, %cst_46 {dimension_numbers = #tpu.dot_dimension_numbers<[1], [0], [0], [1], [0, 0, 1, 1], [], []>} : vector<128x24xbf16>, vector<24x8xbf16>, vector<128x8xf32> -> vector<128x8xf32>
    %75 = arith.addf %66, %74 : vector<128x8xf32>
    %c32_i32_47 = arith.constant 32 : i32
    %76 = arith.addi %56, %c32_i32_47 : i32
    %77 = arith.index_cast %76 : i32 to index
    %c0_48 = arith.constant 0 : index
    %78 = vector.load %arg7[%77, %c0_48] : memref<224x8xbf16, #tpu.memory_space<vmem>>, vector<130x8xbf16>
    %79 = vector.extract_strided_slice %78 {offsets = [0, 0], sizes = [128, 8], strides = [1, 1]} : vector<130x8xbf16> to vector<128x8xbf16>
    %80 = vector.extract_strided_slice %78 {offsets = [1, 0], sizes = [128, 8], strides = [1, 1]} : vector<130x8xbf16> to vector<128x8xbf16>
    %81 = vector.extract_strided_slice %78 {offsets = [2, 0], sizes = [128, 8], strides = [1, 1]} : vector<130x8xbf16> to vector<128x8xbf16>
    %82 = tpu.concatenate %79, %80, %81 in 1 : vector<128x8xbf16>, vector<128x8xbf16>, vector<128x8xbf16> -> vector<128x24xbf16>
    %cst_49 = arith.constant dense<0.000000e+00> : vector<128x8xf32>
    %83 = tpu.matmul %82, %11, %cst_49 {dimension_numbers = #tpu.dot_dimension_numbers<[1], [0], [0], [1], [0, 0, 1, 1], [], []>} : vector<128x24xbf16>, vector<24x8xbf16>, vector<128x8xf32> -> vector<128x8xf32>
    %84 = arith.addf %75, %83 : vector<128x8xf32>
    %85 = vector.broadcast %13 : vector<1x8xf32> to vector<128x8xf32>
    %86 = arith.addf %84, %85 : vector<128x8xf32>
    %cst_50 = arith.constant 0.000000e+00 : f32
    %87 = vector.broadcast %cst_50 : f32 to vector<128x8xf32>
    %88 = arith.maximumf %86, %87 : vector<128x8xf32>
    %89 = arith.index_cast %56 : i32 to index
    %c0_51 = arith.constant 0 : index
    %90 = vector.load %arg6[%89, %c0_51] : memref<256x8xf32, #tpu.memory_space<vmem>>, vector<128x8xf32>
    tpu.vector_store %arg6[%89, %c0_51], %88 {strides = array<i32>} : memref<256x8xf32, #tpu.memory_space<vmem>>, vector<128x8xf32>,
    %c1_i32_52 = arith.constant 1 : i32
    %cst_53 = arith.constant 0.000000e+00 : f32
    %91 = vector.broadcast %cst_53 : f32 to vector<60x8xf32>
    %c128_54 = arith.constant 128 : index
    %c0_55 = arith.constant 0 : index
    %92 = vector.load %arg7[%c128_54, %c0_55] : memref<224x8xbf16, #tpu.memory_space<vmem>>, vector<62x8xbf16>
    %93 = vector.extract_strided_slice %92 {offsets = [0, 0], sizes = [60, 8], strides = [1, 1]} : vector<62x8xbf16> to vector<60x8xbf16>
    %94 = vector.extract_strided_slice %92 {offsets = [1, 0], sizes = [60, 8], strides = [1, 1]} : vector<62x8xbf16> to vector<60x8xbf16>
    %95 = vector.extract_strided_slice %92 {offsets = [2, 0], sizes = [60, 8], strides = [1, 1]} : vector<62x8xbf16> to vector<60x8xbf16>
    %96 = tpu.concatenate %93, %94, %95 in 1 : vector<60x8xbf16>, vector<60x8xbf16>, vector<60x8xbf16> -> vector<60x24xbf16>
    %cst_56 = arith.constant dense<0.000000e+00> : vector<60x8xf32>
    %97 = tpu.matmul %96, %7, %cst_56 {dimension_numbers = #tpu.dot_dimension_numbers<[1], [0], [0], [1], [0, 0, 1, 1], [], []>} : vector<60x24xbf16>, vector<24x8xbf16>, vector<60x8xf32> -> vector<60x8xf32>
    %98 = arith.addf %91, %97 : vector<60x8xf32>
    %c144_57 = arith.constant 144 : index
    %c0_58 = arith.constant 0 : index
    %99 = vector.load %arg7[%c144_57, %c0_58] : memref<224x8xbf16, #tpu.memory_space<vmem>>, vector<62x8xbf16>
    %100 = vector.extract_strided_slice %99 {offsets = [0, 0], sizes = [60, 8], strides = [1, 1]} : vector<62x8xbf16> to vector<60x8xbf16>
    %101 = vector.extract_strided_slice %99 {offsets = [1, 0], sizes = [60, 8], strides = [1, 1]} : vector<62x8xbf16> to vector<60x8xbf16>
    %102 = vector.extract_strided_slice %99 {offsets = [2, 0], sizes = [60, 8], strides = [1, 1]} : vector<62x8xbf16> to vector<60x8xbf16>
    %103 = tpu.concatenate %100, %101, %102 in 1 : vector<60x8xbf16>, vector<60x8xbf16>, vector<60x8xbf16> -> vector<60x24xbf16>
    %cst_59 = arith.constant dense<0.000000e+00> : vector<60x8xf32>
    %104 = tpu.matmul %103, %9, %cst_59 {dimension_numbers = #tpu.dot_dimension_numbers<[1], [0], [0], [1], [0, 0, 1, 1], [], []>} : vector<60x24xbf16>, vector<24x8xbf16>, vector<60x8xf32> -> vector<60x8xf32>
    %105 = arith.addf %98, %104 : vector<60x8xf32>
    %c160_60 = arith.constant 160 : index
    %c0_61 = arith.constant 0 : index
    %106 = vector.load %arg7[%c160_60, %c0_61] : memref<224x8xbf16, #tpu.memory_space<vmem>>, vector<62x8xbf16>
    %107 = vector.extract_strided_slice %106 {offsets = [0, 0], sizes = [60, 8], strides = [1, 1]} : vector<62x8xbf16> to vector<60x8xbf16>
    %108 = vector.extract_strided_slice %106 {offsets = [1, 0], sizes = [60, 8], strides = [1, 1]} : vector<62x8xbf16> to vector<60x8xbf16>
    %109 = vector.extract_strided_slice %106 {offsets = [2, 0], sizes = [60, 8], strides = [1, 1]} : vector<62x8xbf16> to vector<60x8xbf16>
    %110 = tpu.concatenate %107, %108, %109 in 1 : vector<60x8xbf16>, vector<60x8xbf16>, vector<60x8xbf16> -> vector<60x24xbf16>
    %cst_62 = arith.constant dense<0.000000e+00> : vector<60x8xf32>
    %111 = tpu.matmul %110, %11, %cst_62 {dimension_numbers = #tpu.dot_dimension_numbers<[1], [0], [0], [1], [0, 0, 1, 1], [], []>} : vector<60x24xbf16>, vector<24x8xbf16>, vector<60x8xf32> -> vector<60x8xf32>
    %112 = arith.addf %105, %111 : vector<60x8xf32>
    %113 = vector.broadcast %13 : vector<1x8xf32> to vector<60x8xf32>
    %114 = arith.addf %112, %113 : vector<60x8xf32>
    %cst_63 = arith.constant 0.000000e+00 : f32
    %115 = vector.broadcast %cst_63 : f32 to vector<60x8xf32>
    %116 = arith.maximumf %114, %115 : vector<60x8xf32>
    %c128_64 = arith.constant 128 : index
    %c0_65 = arith.constant 0 : index
    %117 = vector.load %arg6[%c128_64, %c0_65] : memref<256x8xf32, #tpu.memory_space<vmem>>, vector<60x8xf32>
    tpu.vector_store %arg6[%c128_64, %c0_65], %116 {strides = array<i32>} : memref<256x8xf32, #tpu.memory_space<vmem>>, vector<60x8xf32>,
    return
  }
  func.func @transform_0(%arg0: i32) -> (i32, i32) {
    %c0_i32 = arith.constant 0 : i32
    %c0_i32_0 = arith.constant 0 : i32
    return %arg0, %c0_i32 : i32, i32
  }
  func.func @transform_1(%arg0: i32) -> (i32, i32, i32) {
    %c0_i32 = arith.constant 0 : i32
    %c0_i32_0 = arith.constant 0 : i32
    %c0_i32_1 = arith.constant 0 : i32
    %c0_i32_2 = arith.constant 0 : i32
    return %c0_i32, %c0_i32_0, %c0_i32_1 : i32, i32, i32
  }
  func.func @transform_2(%arg0: i32) -> (i32, i32) {
    %c0_i32 = arith.constant 0 : i32
    %c0_i32_0 = arith.constant 0 : i32
    %c0_i32_1 = arith.constant 0 : i32
    return %c0_i32, %c0_i32_0 : i32, i32
  }
  func.func @transform_3(%arg0: i32) -> (i32, i32, i32) {
    %c0_i32 = arith.constant 0 : i32
    %c0_i32_0 = arith.constant 0 : i32
    %c0_i32_1 = arith.constant 0 : i32
    %c0_i32_2 = arith.constant 0 : i32
    return %c0_i32, %c0_i32_0, %c0_i32_1 : i32, i32, i32
  }
  func.func @transform_4(%arg0: i32) -> (i32, i32) {
    %c0_i32 = arith.constant 0 : i32
    %c0_i32_0 = arith.constant 0 : i32
    %c0_i32_1 = arith.constant 0 : i32
    return %c0_i32, %c0_i32_0 : i32, i32
  }
  func.func @transform_5(%arg0: i32) -> (i32, i32) {
    %c0_i32 = arith.constant 0 : i32
    %c0_i32_0 = arith.constant 0 : i32
    return %arg0, %c0_i32 : i32, i32
  }
}

</mosaic_0001>

<llo_original>
// kernel: tpu_custom_call.1
$region0: #{tpu_custom_call.1}
  #allocation0 [shape = 'u32[]', space=smem, size = 0x4, offset = 0x4, fixed_abs, tag = 'smem constant byte address 0x4 - core index']
  #allocation1 [shape = 'u32[144,128]{1,0:T(1,128)}', space=vmem, size = 0x12000, scoped, tag = 'internal scratch']
  #allocation2 [shape = 'bf16[224,8]{1,0:T(8,128)(2,1)}', space=vmem, size = 0xe000, scoped, tag = 'scratch operand']
  %s0 = inlined_call_operand.vmem [shape: bf16[512,12], index: 0, kind: input, shape index: {}]
  %s1 = inlined_call_operand.vmem [shape: bf16[3,12,8], index: 1, kind: input, shape index: {}]
  %s2 = inlined_call_operand.vmem [shape: f32[1,8], index: 2, kind: input, shape index: {}]
  %s3 = inlined_call_operand.vmem [shape: bf16[3,24,8], index: 3, kind: input, shape index: {}]
  %s4 = inlined_call_operand.vmem [shape: f32[1,8], index: 4, kind: input, shape index: {}]
  %s5 = inlined_call_operand.vmem [shape: f32[512,8], index: 5, kind: output, shape index: {}]
  %s6 = sld [smem:[#allocation0]]
  $region53: #{tpu_custom_call.1} parent=0
    _
  %s8 = ssub.s32 1, %s6
  %s9 = scalar_select 0, %s8, %s6
  loop: start=0, step=1, limit=4
  $region2: #{tpu_custom_call.1} parent=0 // loop_pre_header
    _
  $region3: #{tpu_custom_call.1} parent=0 // loop_header
    %s11 = sphi 0, %s15
    %p12 = scmp.ge.s32.totalorder %s11, 4
    %s21 = sphi 0, %s23
    %s24 = sphi 0, %s21
    %s25 = sphi 0, %s24
    %s41 = sphi 0, %s25
    %s45 = sphi 0, %s45
    %s47 = sphi 0, %s45
    %s48 = sphi 0, %s47
    %s62 = sphi 0, %s48
    %s66 = sphi 0, %s66
    %s68 = sphi 0, %s66
    %s69 = sphi 0, %s68
    %s83 = sphi 0, %s69
    %s87 = sphi 0, %s87
    %s89 = sphi 0, %s87
    %s90 = sphi 0, %s89
    %s104 = sphi 0, %s90
    %s108 = sphi 0, %s108
    %s110 = sphi 0, %s108
    %s111 = sphi 0, %s110
    %s125 = sphi 0, %s111
    %s131 = sphi 0, %s133
    %s134 = sphi 0, %s131
    %s135 = sphi 0, %s134
    %s151 = sphi 0, %s135
  $region4: #{tpu_custom_call.1} parent=0 // loop_header_branch
    %14 = sbr.rel (%p12) target = $region8
  $region5: #{tpu_custom_call.1} parent=0 // loop_body
    %s16 = ssub.s32 %s11, 1
    %s17 = ssub.s32 %s11, 2
    %s18 = sadd.s32 %s11, 1
    %s19 = ssub.s32 %s11, %s18
    %p20 = scmp.eq.s32.totalorder %s19, 0
    %s22 = sadd.s32 %s21, 1
    %s23 = scalar_select %p20, %s21, %s22
    %p26 = pneg %p20
    %p27 = scmp.eq.s32.totalorder %s11, 1
    %p28 = por %p26, %p27
    %p29 = scmp.ne.s32.totalorder %s21, %s24
    %p30 = scmp.eq.s32.totalorder %s11, 0
    %p31 = por %p29, %p30
    %p32 = scmp.ne.s32.totalorder %s21, %s24
    %p33 = scmp.eq.s32.totalorder %s16, 1
    %p34 = por %p32, %p33
    %p35 = scmp.ne.s32.totalorder %s24, %s25
    %p36 = scmp.eq.s32.totalorder %s16, 0
    %p37 = por %p35, %p36
    %p38 = scmp.ne.s32.totalorder %s24, %s25
    %p39 = scmp.eq.s32.totalorder %s17, 1
    %p40 = por %p38, %p39
    %p42 = scmp.ne.s32.totalorder %s25, %s41
    %p43 = scmp.eq.s32.totalorder %s17, 0
    %p44 = por %p42, %p43
    %s46 = sadd.s32 %s45, 1
    %p49 = scmp.eq.s32.totalorder %s11, 1
    %p50 = scmp.ne.s32.totalorder %s45, %s47
    %p51 = scmp.eq.s32.totalorder %s11, 0
    %p52 = por %p50, %p51
    %p53 = scmp.ne.s32.totalorder %s45, %s47
    %p54 = scmp.eq.s32.totalorder %s16, 1
    %p55 = por %p53, %p54
    %p56 = scmp.ne.s32.totalorder %s47, %s48
    %p57 = scmp.eq.s32.totalorder %s16, 0
    %p58 = por %p56, %p57
    %p59 = scmp.ne.s32.totalorder %s47, %s48
    %p60 = scmp.eq.s32.totalorder %s17, 1
    %p61 = por %p59, %p60
    %p63 = scmp.ne.s32.totalorder %s48, %s62
    %p64 = scmp.eq.s32.totalorder %s17, 0
    %p65 = por %p63, %p64
    %s67 = sadd.s32 %s66, 1
    %p70 = scmp.eq.s32.totalorder %s11, 1
    %p71 = scmp.ne.s32.totalorder %s66, %s68
    %p72 = scmp.eq.s32.totalorder %s11, 0
    %p73 = por %p71, %p72
    %p74 = scmp.ne.s32.totalorder %s66, %s68
    %p75 = scmp.eq.s32.totalorder %s16, 1
    %p76 = por %p74, %p75
    %p77 = scmp.ne.s32.totalorder %s68, %s69
    %p78 = scmp.eq.s32.totalorder %s16, 0
    %p79 = por %p77, %p78
    %p80 = scmp.ne.s32.totalorder %s68, %s69
    %p81 = scmp.eq.s32.totalorder %s17, 1
    %p82 = por %p80, %p81
    %p84 = scmp.ne.s32.totalorder %s69, %s83
    %p85 = scmp.eq.s32.totalorder %s17, 0
    %p86 = por %p84, %p85
    %s88 = sadd.s32 %s87, 1
    %p91 = scmp.eq.s32.totalorder %s11, 1
    %p92 = scmp.ne.s32.totalorder %s87, %s89
    %p93 = scmp.eq.s32.totalorder %s11, 0
    %p94 = por %p92, %p93
    %p95 = scmp.ne.s32.totalorder %s87, %s89
    %p96 = scmp.eq.s32.totalorder %s16, 1
    %p97 = por %p95, %p96
    %p98 = scmp.ne.s32.totalorder %s89, %s90
    %p99 = scmp.eq.s32.totalorder %s16, 0
    %p100 = por %p98, %p99
    %p101 = scmp.ne.s32.totalorder %s89, %s90
    %p102 = scmp.eq.s32.totalorder %s17, 1
    %p103 = por %p101, %p102
    %p105 = scmp.ne.s32.totalorder %s90, %s104
    %p106 = scmp.eq.s32.totalorder %s17, 0
    %p107 = por %p105, %p106
    %s109 = sadd.s32 %s108, 1
    %p112 = scmp.eq.s32.totalorder %s11, 1
    %p113 = scmp.ne.s32.totalorder %s108, %s110
    %p114 = scmp.eq.s32.totalorder %s11, 0
    %p115 = por %p113, %p114
    %p116 = scmp.ne.s32.totalorder %s108, %s110
    %p117 = scmp.eq.s32.totalorder %s16, 1
    %p118 = por %p116, %p117
    %p119 = scmp.ne.s32.totalorder %s110, %s111
    %p120 = scmp.eq.s32.totalorder %s16, 0
    %p121 = por %p119, %p120
    %p122 = scmp.ne.s32.totalorder %s110, %s111
    %p123 = scmp.eq.s32.totalorder %s17, 1
    %p124 = por %p122, %p123
    %p126 = scmp.ne.s32.totalorder %s111, %s125
    %p127 = scmp.eq.s32.totalorder %s17, 0
    %p128 = por %p126, %p127
    %s129 = ssub.s32 %s11, %s18
    %p130 = scmp.eq.s32.totalorder %s129, 0
    %s132 = sadd.s32 %s131, 1
    %s133 = scalar_select %p130, %s131, %s132
    %p136 = pneg %p130
    %p137 = scmp.eq.s32.totalorder %s11, 1
    %p138 = por %p136, %p137
    %p139 = scmp.ne.s32.totalorder %s131, %s134
    %p140 = scmp.eq.s32.totalorder %s11, 0
    %p141 = por %p139, %p140
    %p142 = scmp.ne.s32.totalorder %s131, %s134
    %p143 = scmp.eq.s32.totalorder %s16, 1
    %p144 = por %p142, %p143
    %p145 = scmp.ne.s32.totalorder %s134, %s135
    %p146 = scmp.eq.s32.totalorder %s16, 0
    %p147 = por %p145, %p146
    %p148 = scmp.ne.s32.totalorder %s134, %s135
    %p149 = scmp.eq.s32.totalorder %s17, 1
    %p150 = por %p148, %p149
    %p152 = scmp.ne.s32.totalorder %s135, %s151
    %p153 = scmp.eq.s32.totalorder %s17, 0
    %p154 = por %p152, %p153
    %p155 = scmp.le.s32.totalorder 1, %s11
    %p156 = scmp.lt.s32.totalorder %s11, 3
    %p157 = pnand %p155, %p156
    %p158 = pneg %p157
    // Predicated region
    $region9: #{tpu_custom_call.1} parent=5 // pred_check
      _
    $region10: #{tpu_custom_call.1} parent=5 // pred_check_branch
      %160 = sbr.rel (%p157) target = $region12
    $region11: #{tpu_custom_call.1} parent=5 // pred_region
      %s161 = ssub.s32 %s11, 1
      // Predicated region
      $region13: #{tpu_custom_call.1} parent=11 // pred_check
        %p162 = pneg %p58
      $region14: #{tpu_custom_call.1} parent=11 // pred_check_branch
        %164 = sbr.rel (%p162) target = $region16
      $region15: #{tpu_custom_call.1} parent=11 // pred_region
        _
      $region16: #{tpu_custom_call.1} parent=11 // pred_fallthru
        _
      // Predicated region
      $region17: #{tpu_custom_call.1} parent=11 // pred_check
        %p165 = pneg %p79
      $region18: #{tpu_custom_call.1} parent=11 // pred_check_branch
        %167 = sbr.rel (%p165) target = $region20
      $region19: #{tpu_custom_call.1} parent=11 // pred_region
        _
      $region20: #{tpu_custom_call.1} parent=11 // pred_fallthru
        _
      // Predicated region
      $region21: #{tpu_custom_call.1} parent=11 // pred_check
        %p168 = pneg %p100
      $region22: #{tpu_custom_call.1} parent=11 // pred_check_branch
        %170 = sbr.rel (%p168) target = $region24
      $region23: #{tpu_custom_call.1} parent=11 // pred_region
        _
      $region24: #{tpu_custom_call.1} parent=11 // pred_fallthru
        _
      // Predicated region
      $region25: #{tpu_custom_call.1} parent=11 // pred_check
        %p171 = pneg %p121
      $region26: #{tpu_custom_call.1} parent=11 // pred_check_branch
        %173 = sbr.rel (%p171) target = $region28
      $region27: #{tpu_custom_call.1} parent=11 // pred_region
        _
      $region28: #{tpu_custom_call.1} parent=11 // pred_fallthru
        _
    $region12: #{tpu_custom_call.1} parent=5 // pred_fallthru
      _
    %p174 = scmp.lt.s32.totalorder %s11, 2
    // Predicated region
    $region29: #{tpu_custom_call.1} parent=5 // pred_check
      %p175 = pneg %p174
    $region30: #{tpu_custom_call.1} parent=5 // pred_check_branch
      %177 = sbr.rel (%p175) target = $region32
    $region31: #{tpu_custom_call.1} parent=5 // pred_region
      // Predicated region
      $region33: #{tpu_custom_call.1} parent=31 // pred_check
        %p178 = pneg %p31
      $region34: #{tpu_custom_call.1} parent=31 // pred_check_branch
        %180 = sbr.rel (%p178) target = $region36
      $region35: #{tpu_custom_call.1} parent=31 // pred_region
        %s181 = smul.u32 32, %s11
        %p182 = scmp.lt.s32.totalorder %s181, 63
        %s183 = scalar_select %p182, %s181, 63
        %s184 = smul.addr %s183, 4
        %s185 = scalar_lea.vmem %s0, %s184
        %s186 = smul.u32 32, %s11
      $region36: #{tpu_custom_call.1} parent=31 // pred_fallthru
        _
    $region32: #{tpu_custom_call.1} parent=5 // pred_fallthru
      _
    %p187 = scmp.le.s32.totalorder 1, %s11
    %p188 = scmp.lt.s32.totalorder %s11, 3
    %p189 = pnand %p187, %p188
    %p190 = pneg %p189
    // Predicated region
    $region37: #{tpu_custom_call.1} parent=5 // pred_check
      _
    $region38: #{tpu_custom_call.1} parent=5 // pred_check_branch
      %192 = sbr.rel (%p189) target = $region40
    $region39: #{tpu_custom_call.1} parent=5 // pred_region
      %s193 = ssub.s32 %s11, 1
      %s194 = smul.u32 32, %s16
      %p195 = scmp.lt.s32.totalorder %s194, 63
      %s196 = scalar_select %p195, %s194, 63
      %s197 = smul.addr %s196, 4
      %s198 = scalar_lea.vmem %s0, %s197
      %p199 = pneg %p37
      %p200 = pneg %p34
      %p201 = pneg %p58
      %p202 = pneg %p55
      %p203 = pneg %p79
      %p204 = pneg %p76
      %p205 = pneg %p100
      %p206 = pneg %p97
      %p207 = pneg %p121
      %p208 = pneg %p118
      %p209 = pneg %p147
      %p210 = pneg %p144
      %s211 = smul.u32 32, %s16
      %p212 = scmp.lt.s32.totalorder %s211, 63
      %s213 = scalar_select %p212, %s211, 63
      %s214 = smul.addr %s213, 8
      %s215 = scalar_lea.vmem %s5, %s214
      %s216 = smul.u32 32, %s16
      %p217 = scmp.lt.s32.totalorder %s216, 63
      %s218 = scalar_select %p217, %s216, 63
      %s219 = smul.addr %s218, 4
      %s220 = scalar_lea.vmem %s0, %s219
      %s221 = smul.u32 32, %s16
      %s222 = smul.u32 32, %s16
      %p223 = scmp.lt.s32.totalorder %s222, 63
      %s224 = scalar_select %p223, %s222, 63
      %s225 = smul.addr %s224, 8
      %s226 = scalar_lea.vmem %s5, %s225
      %s227 = smul.u32 32, %s16
      %v229 = vld [vmem:[%s1] sm:$0xf]
      %v230 = vld [vmem:[%s1 + $0x4] sm:$0x3]
      %s231 = scalar_lea.vmem %s1, 8
      %v232 = vld [vmem:[%s231] sm:$0xf]
      %v233 = vld [vmem:[%s231 + $0x4] sm:$0x3]
      %s234 = scalar_lea.vmem %s1, 16
      %v235 = vld [vmem:[%s234] sm:$0xf]
      %v236 = vld [vmem:[%s234 + $0x4] sm:$0x3]
      %v237 = vld [vmem:[%s3] sm:$0xf]
      %v238 = vld [vmem:[%s3 + $0x4] sm:$0xf]
      %v239 = vld [vmem:[%s3 + $0x8] sm:$0xf]
      %s240 = scalar_lea.vmem %s3, 12
      %v241 = vld [vmem:[%s240] sm:$0xf]
      %v242 = vld [vmem:[%s240 + $0x4] sm:$0xf]
      %v243 = vld [vmem:[%s240 + $0x8] sm:$0xf]
      %s244 = scalar_lea.vmem %s3, 24
      %v245 = vld [vmem:[%s244] sm:$0xf]
      %v246 = vld [vmem:[%s244 + $0x4] sm:$0xf]
      %v247 = vld [vmem:[%s244 + $0x8] sm:$0xf]
      %v248 = vld [vmem:[%s2] sm:$0x1]
      %v249 = vld [vmem:[%s4] sm:$0x1]
      %v250 = vld [vmem:[%s220] sm:$0xf]
      %v251 = vld [vmem:[%s220 + $0x4] sm:$0xf]
      %v252 = vld [vmem:[%s220 + $0x8] sm:$0xf]
      %v253 = vld [vmem:[%s220 + $0xc] sm:$0xf]
      %v254 = vld [vmem:[%s220 + $0x10] sm:$0xf]
      %v255 = vld [vmem:[%s220 + $0x14] sm:$0xf]
      %v256 = vld [vmem:[%s220 + $0x18] sm:$0xf]
      %v257 = vld [vmem:[%s220 + $0x1c] sm:$0xf]
      %v258 = vld [vmem:[%s220 + $0x20] sm:$0xf]
      %v259 = vld [vmem:[%s220 + $0x24] sm:$0xf]
      %v260 = vld [vmem:[%s220 + $0x28] sm:$0xf]
      %v261 = vld [vmem:[%s220 + $0x2c] sm:$0xf]
      %v262 = vld [vmem:[%s220 + $0x30] sm:$0xf]
      %v263 = vld [vmem:[%s220 + $0x34] sm:$0xf]
      %v264 = vld [vmem:[%s220 + $0x38] sm:$0xf]
      %v265 = vld [vmem:[%s220 + $0x3c] sm:$0xf]
      %s266 = sadd.s32 0, 16
      %s267 = sshra.s32 %s266, 3
      %s268 = sand.u32 %s266, 7
      %s269 = smul.addr %s267, 4
      %s270 = scalar_lea.vmem %s220, %s269
      %v271 = vld [vmem:[%s270] sm:$0xf]
      %v272 = vld [vmem:[%s270 + $0x4] sm:$0xf]
      %v273 = vld [vmem:[%s270 + $0x8] sm:$0xf]
      %v274 = vld [vmem:[%s270 + $0xc] sm:$0xf]
      %v275 = vld [vmem:[%s270 + $0x10] sm:$0xf]
      %v276 = vld [vmem:[%s270 + $0x14] sm:$0xf]
      %v277 = vld [vmem:[%s270 + $0x18] sm:$0xf]
      %v278 = vld [vmem:[%s270 + $0x1c] sm:$0xf]
      %v279 = vld [vmem:[%s270 + $0x20] sm:$0xf]
      %v280 = vld [vmem:[%s270 + $0x24] sm:$0xf]
      %v281 = vld [vmem:[%s270 + $0x28] sm:$0xf]
      %v282 = vld [vmem:[%s270 + $0x2c] sm:$0xf]
      %v283 = vld [vmem:[%s270 + $0x30] sm:$0xf]
      %v284 = vld [vmem:[%s270 + $0x34] sm:$0xf]
      %v285 = vld [vmem:[%s270 + $0x38] sm:$0xf]
      %v286 = vld [vmem:[%s270 + $0x3c] sm:$0xf]
      %v303 = vunpack.c.l.b16 %v271
      %v304 = vunpack.c.l.b16 %v272
      %v305 = vunpack.c.l.b16 %v273
      %v306 = vunpack.c.l.b16 %v274
      %v307 = vunpack.c.l.b16 %v275
      %v308 = vunpack.c.l.b16 %v276
      %v309 = vunpack.c.l.b16 %v277
      %v310 = vunpack.c.l.b16 %v278
      %v311 = vunpack.c.l.b16 %v279
      %v312 = vunpack.c.l.b16 %v280
      %v313 = vunpack.c.l.b16 %v281
      %v314 = vunpack.c.l.b16 %v282
      %v315 = vunpack.c.l.b16 %v283
      %v316 = vunpack.c.l.b16 %v284
      %v317 = vunpack.c.l.b16 %v285
      %v318 = vunpack.c.l.b16 %v286
      %v319 = vpack.c.b16 %v304, %v303
      %v320 = vpack.c.b16 %v306, %v305
      %v321 = vpack.c.b16 %v308, %v307
      %v322 = vpack.c.b16 %v310, %v309
      %v323 = vpack.c.b16 %v312, %v311
      %v324 = vpack.c.b16 %v314, %v313
      %v325 = vpack.c.b16 %v316, %v315
      %v326 = vpack.c.b16 %v318, %v317
      %v329 = vunpack.c.l.b16 %v232
      %v330 = vunpack.c.l.b16 %v233
      %v331 = vpack.c.b16 %v330, %v329
      %vm332 = vcmask 97280
      %v334 = vsel %vm332, %v319, 0
      %v337 = vsel %vm332, %v320, 0
      %v340 = vsel %vm332, %v321, 0
      %v343 = vsel %vm332, %v322, 0
      %v346 = vsel %vm332, %v323, 0
      %v349 = vsel %vm332, %v324, 0
      %v352 = vsel %vm332, %v325, 0
      %v355 = vsel %vm332, %v326, 0
      %vm357 = vcmask 1045504
      %v359 = vsel %vm357, %v331, 0
      %361 = vmatprep.subr.bf16.mxu0 0
      %362 = vmatpush1.bf16.msra.mxu0 0
      %363 = vmatprep.subr.bf16.mxu0 0
      %364 = vmatpush1.bf16.msra.mxu0 0
      %365 = vmatprep.subr.bf16.mxu0 0
      %366 = vmatpush1.bf16.msra.mxu0 0
      %367 = vmatprep.subr.bf16.mxu0 0
      %368 = vmatpush1.bf16.msra.mxu0 0
      %369 = vmatprep.subr.bf16.mxu0 0
      %370 = vmatpush1.bf16.msra.mxu0 0
      %371 = vmatprep.subr.bf16.mxu0 0
      %372 = vmatpush1.bf16.msra.mxu0 0
      %373 = vmatprep.subr.bf16.mxu0 0
      %374 = vmatpush1.bf16.msra.mxu0 0
      %375 = vmatprep.subr.bf16.mxu0 0
      %376 = vmatpush1.bf16.msra.mxu0 %v359
      %377 = vmatprep.subr.bf16.mxu0 0
      %378 = vmatpush2.bf16.msra.mxu0 0
      %379 = vmatprep.subr.bf16.mxu0 0
      %380 = vmatpush2.bf16.msra.mxu0 0
      %381 = vmatprep.subr.bf16.mxu0 0
      %382 = vmatpush2.bf16.msra.mxu0 0
      %383 = vmatprep.subr.bf16.mxu0 0
      %384 = vmatpush2.bf16.msra.mxu0 0
      %385 = vmatprep.subr.bf16.mxu0 0
      %386 = vmatpush2.bf16.msra.mxu0 0
      %387 = vmatprep.subr.bf16.mxu0 0
      %388 = vmatpush2.bf16.msra.mxu0 0
      %389 = vmatprep.subr.bf16.mxu0 0
      %390 = vmatpush2.bf16.msra.mxu0 0
      %391 = vmatprep.subr.bf16.mxu0 0
      %392 = vmatpush2.bf16.msra.mxu0 0
      %393 = vmatprep.mubr.bf16.mxu0 0
      %394 = vmatmul.mubr.bf16.gmra.mxu0 %v334
      %v395 = vpop.f32.mrf.mxu0
      %v396 = vadd.f32 0.0, %v395
      %v397 = vpop.f32.mrf.mxu0
      %v398 = vpop.f32.mrf.mxu0
      %v399 = vadd.f32 0.0, %v398
      %v400 = vpop.f32.mrf.mxu0
      %401 = vmatprep.mubr.bf16.mxu0 0
      %402 = vmatmul.mubr.bf16.gmra.mxu0 %v337
      %v403 = vpop.f32.mrf.mxu0
      %v404 = vadd.f32 0.0, %v403
      %v405 = vpop.f32.mrf.mxu0
      %v406 = vpop.f32.mrf.mxu0
      %v407 = vadd.f32 0.0, %v406
      %v408 = vpop.f32.mrf.mxu0
      %409 = vmatprep.mubr.bf16.mxu0 0
      %410 = vmatmul.mubr.bf16.gmra.mxu0 %v340
      %v411 = vpop.f32.mrf.mxu0
      %v412 = vadd.f32 0.0, %v411
      %v413 = vpop.f32.mrf.mxu0
      %v414 = vpop.f32.mrf.mxu0
      %v415 = vadd.f32 0.0, %v414
      %v416 = vpop.f32.mrf.mxu0
      %417 = vmatprep.mubr.bf16.mxu0 0
      %418 = vmatmul.mubr.bf16.gmra.mxu0 %v343
      %v419 = vpop.f32.mrf.mxu0
      %v420 = vadd.f32 0.0, %v419
      %v421 = vpop.f32.mrf.mxu0
      %v422 = vpop.f32.mrf.mxu0
      %v423 = vadd.f32 0.0, %v422
      %v424 = vpop.f32.mrf.mxu0
      %425 = vmatprep.mubr.bf16.mxu0 0
      %426 = vmatmul.mubr.bf16.gmra.mxu0 %v346
      %v427 = vpop.f32.mrf.mxu0
      %v428 = vadd.f32 0.0, %v427
      %v429 = vpop.f32.mrf.mxu0
      %v430 = vpop.f32.mrf.mxu0
      %v431 = vadd.f32 0.0, %v430
      %v432 = vpop.f32.mrf.mxu0
      %433 = vmatprep.mubr.bf16.mxu0 0
      %434 = vmatmul.mubr.bf16.gmra.mxu0 %v349
      %v435 = vpop.f32.mrf.mxu0
      %v436 = vadd.f32 0.0, %v435
      %v437 = vpop.f32.mrf.mxu0
      %v438 = vpop.f32.mrf.mxu0
      %v439 = vadd.f32 0.0, %v438
      %v440 = vpop.f32.mrf.mxu0
      %441 = vmatprep.mubr.bf16.mxu0 0
      %442 = vmatmul.mubr.bf16.gmra.mxu0 %v352
      %v443 = vpop.f32.mrf.mxu0
      %v444 = vadd.f32 0.0, %v443
      %v445 = vpop.f32.mrf.mxu0
      %v446 = vpop.f32.mrf.mxu0
      %v447 = vadd.f32 0.0, %v446
      %v448 = vpop.f32.mrf.mxu0
      %449 = vmatprep.mubr.bf16.mxu0 0
      %450 = vmatmul.mubr.bf16.gmra.mxu0 %v355
      %v451 = vpop.f32.mrf.mxu0
      %v452 = vadd.f32 0.0, %v451
      %v453 = vpop.f32.mrf.mxu0
      %v454 = vpop.f32.mrf.mxu0
      %v455 = vadd.f32 0.0, %v454
      %v456 = vpop.f32.mrf.mxu0
      %457 = vdwg.mxu0
      %v474 = vunpack.c.l.b16 %v250
      %v475 = vunpack.c.l.b16 %v251
      %v476 = vunpack.c.l.b16 %v252
      %v477 = vunpack.c.l.b16 %v253
      %v478 = vunpack.c.l.b16 %v254
      %v479 = vunpack.c.l.b16 %v255
      %v480 = vunpack.c.l.b16 %v256
      %v481 = vunpack.c.l.b16 %v257
      %v482 = vunpack.c.l.b16 %v258
      %v483 = vunpack.c.l.b16 %v259
      %v484 = vunpack.c.l.b16 %v260
      %v485 = vunpack.c.l.b16 %v261
      %v486 = vunpack.c.l.b16 %v262
      %v487 = vunpack.c.l.b16 %v263
      %v488 = vunpack.c.l.b16 %v264
      %v489 = vunpack.c.l.b16 %v265
      %v490 = vpack.c.b16 %v475, %v474
      %v491 = vpack.c.b16 %v477, %v476
      %v492 = vpack.c.b16 %v479, %v478
      %v493 = vpack.c.b16 %v481, %v480
      %v494 = vpack.c.b16 %v483, %v482
      %v495 = vpack.c.b16 %v485, %v484
      %v496 = vpack.c.b16 %v487, %v486
      %v497 = vpack.c.b16 %v489, %v488
      %v500 = vunpack.c.l.b16 %v229
      %v501 = vunpack.c.l.b16 %v230
      %v502 = vpack.c.b16 %v501, %v500
      %v504 = vsel %vm332, %v490, 0
      %v507 = vsel %vm332, %v491, 0
      %v510 = vsel %vm332, %v492, 0
      %v513 = vsel %vm332, %v493, 0
      %v516 = vsel %vm332, %v494, 0
      %v519 = vsel %vm332, %v495, 0
      %v522 = vsel %vm332, %v496, 0
      %v525 = vsel %vm332, %v497, 0
      %v528 = vsel %vm357, %v502, 0
      %530 = vmatprep.subr.bf16.mxu0 0
      %531 = vmatpush1.bf16.msra.mxu0 0
      %532 = vmatprep.subr.bf16.mxu0 0
      %533 = vmatpush1.bf16.msra.mxu0 0
      %534 = vmatprep.subr.bf16.mxu0 0
      %535 = vmatpush1.bf16.msra.mxu0 0
      %536 = vmatprep.subr.bf16.mxu0 0
      %537 = vmatpush1.bf16.msra.mxu0 0
      %538 = vmatprep.subr.bf16.mxu0 0
      %539 = vmatpush1.bf16.msra.mxu0 0
      %540 = vmatprep.subr.bf16.mxu0 0
      %541 = vmatpush1.bf16.msra.mxu0 0
      %542 = vmatprep.subr.bf16.mxu0 0
      %543 = vmatpush1.bf16.msra.mxu0 0
      %544 = vmatprep.subr.bf16.mxu0 0
      %545 = vmatpush1.bf16.msra.mxu0 %v528
      %546 = vmatprep.subr.bf16.mxu0 0
      %547 = vmatpush2.bf16.msra.mxu0 0
      %548 = vmatprep.subr.bf16.mxu0 0
      %549 = vmatpush2.bf16.msra.mxu0 0
      %550 = vmatprep.subr.bf16.mxu0 0
      %551 = vmatpush2.bf16.msra.mxu0 0
      %552 = vmatprep.subr.bf16.mxu0 0
      %553 = vmatpush2.bf16.msra.mxu0 0
      %554 = vmatprep.subr.bf16.mxu0 0
      %555 = vmatpush2.bf16.msra.mxu0 0
      %556 = vmatprep.subr.bf16.mxu0 0
      %557 = vmatpush2.bf16.msra.mxu0 0
      %558 = vmatprep.subr.bf16.mxu0 0
      %559 = vmatpush2.bf16.msra.mxu0 0
      %560 = vmatprep.subr.bf16.mxu0 0
      %561 = vmatpush2.bf16.msra.mxu0 0
      %562 = vmatprep.mubr.bf16.mxu0 0
      %563 = vmatmul.mubr.bf16.gmra.mxu0 %v504
      %v564 = vpop.f32.mrf.mxu0
      %v565 = vadd.f32 %v396, %v564
      %v566 = vpop.f32.mrf.mxu0
      %v567 = vpop.f32.mrf.mxu0
      %v568 = vadd.f32 %v399, %v567
      %v569 = vpop.f32.mrf.mxu0
      %570 = vmatprep.mubr.bf16.mxu0 0
      %571 = vmatmul.mubr.bf16.gmra.mxu0 %v507
      %v572 = vpop.f32.mrf.mxu0
      %v573 = vadd.f32 %v404, %v572
      %v574 = vpop.f32.mrf.mxu0
      %v575 = vpop.f32.mrf.mxu0
      %v576 = vadd.f32 %v407, %v575
      %v577 = vpop.f32.mrf.mxu0
      %578 = vmatprep.mubr.bf16.mxu0 0
      %579 = vmatmul.mubr.bf16.gmra.mxu0 %v510
      %v580 = vpop.f32.mrf.mxu0
      %v581 = vadd.f32 %v412, %v580
      %v582 = vpop.f32.mrf.mxu0
      %v583 = vpop.f32.mrf.mxu0
      %v584 = vadd.f32 %v415, %v583
      %v585 = vpop.f32.mrf.mxu0
      %586 = vmatprep.mubr.bf16.mxu0 0
      %587 = vmatmul.mubr.bf16.gmra.mxu0 %v513
      %v588 = vpop.f32.mrf.mxu0
      %v589 = vadd.f32 %v420, %v588
      %v590 = vpop.f32.mrf.mxu0
      %v591 = vpop.f32.mrf.mxu0
      %v592 = vadd.f32 %v423, %v591
      %v593 = vpop.f32.mrf.mxu0
      %594 = vmatprep.mubr.bf16.mxu0 0
      %595 = vmatmul.mubr.bf16.gmra.mxu0 %v516
      %v596 = vpop.f32.mrf.mxu0
      %v597 = vadd.f32 %v428, %v596
      %v598 = vpop.f32.mrf.mxu0
      %v599 = vpop.f32.mrf.mxu0
      %v600 = vadd.f32 %v431, %v599
      %v601 = vpop.f32.mrf.mxu0
      %602 = vmatprep.mubr.bf16.mxu0 0
      %603 = vmatmul.mubr.bf16.gmra.mxu0 %v519
      %v604 = vpop.f32.mrf.mxu0
      %v605 = vadd.f32 %v436, %v604
      %v606 = vpop.f32.mrf.mxu0
      %v607 = vpop.f32.mrf.mxu0
      %v608 = vadd.f32 %v439, %v607
      %v609 = vpop.f32.mrf.mxu0
      %610 = vmatprep.mubr.bf16.mxu0 0
      %611 = vmatmul.mubr.bf16.gmra.mxu0 %v522
      %v612 = vpop.f32.mrf.mxu0
      %v613 = vadd.f32 %v444, %v612
      %v614 = vpop.f32.mrf.mxu0
      %v615 = vpop.f32.mrf.mxu0
      %v616 = vadd.f32 %v447, %v615
      %v617 = vpop.f32.mrf.mxu0
      %618 = vmatprep.mubr.bf16.mxu0 0
      %619 = vmatmul.mubr.bf16.gmra.mxu0 %v525
      %v620 = vpop.f32.mrf.mxu0
      %v621 = vadd.f32 %v452, %v620
      %v622 = vpop.f32.mrf.mxu0
      %v623 = vpop.f32.mrf.mxu0
      %v624 = vadd.f32 %v455, %v623
      %v625 = vpop.f32.mrf.mxu0
      %626 = vdwg.mxu0
      %s627 = sadd.s32 0, 32
      %s628 = sshra.s32 %s627, 3
      %s629 = sand.u32 %s627, 7
      %s630 = smul.addr %s628, 4
      %s631 = scalar_lea.vmem %s220, %s630
      %v632 = vld [vmem:[%s631] sm:$0xf]
      %v633 = vld [vmem:[%s631 + $0x4] sm:$0xf]
      %v634 = vld [vmem:[%s631 + $0x8] sm:$0xf]
      %v635 = vld [vmem:[%s631 + $0xc] sm:$0xf]
      %v636 = vld [vmem:[%s631 + $0x10] sm:$0xf]
      %v637 = vld [vmem:[%s631 + $0x14] sm:$0xf]
      %v638 = vld [vmem:[%s631 + $0x18] sm:$0xf]
      %v639 = vld [vmem:[%s631 + $0x1c] sm:$0xf]
      %v640 = vld [vmem:[%s631 + $0x20] sm:$0xf]
      %v641 = vld [vmem:[%s631 + $0x24] sm:$0xf]
      %v642 = vld [vmem:[%s631 + $0x28] sm:$0xf]
      %v643 = vld [vmem:[%s631 + $0x2c] sm:$0xf]
      %v644 = vld [vmem:[%s631 + $0x30] sm:$0xf]
      %v645 = vld [vmem:[%s631 + $0x34] sm:$0xf]
      %v646 = vld [vmem:[%s631 + $0x38] sm:$0xf]
      %v647 = vld [vmem:[%s631 + $0x3c] sm:$0xf]
      %v664 = vunpack.c.l.b16 %v632
      %v665 = vunpack.c.l.b16 %v633
      %v666 = vunpack.c.l.b16 %v634
      %v667 = vunpack.c.l.b16 %v635
      %v668 = vunpack.c.l.b16 %v636
      %v669 = vunpack.c.l.b16 %v637
      %v670 = vunpack.c.l.b16 %v638
      %v671 = vunpack.c.l.b16 %v639
      %v672 = vunpack.c.l.b16 %v640
      %v673 = vunpack.c.l.b16 %v641
      %v674 = vunpack.c.l.b16 %v642
      %v675 = vunpack.c.l.b16 %v643
      %v676 = vunpack.c.l.b16 %v644
      %v677 = vunpack.c.l.b16 %v645
      %v678 = vunpack.c.l.b16 %v646
      %v679 = vunpack.c.l.b16 %v647
      %v680 = vpack.c.b16 %v665, %v664
      %v681 = vpack.c.b16 %v667, %v666
      %v682 = vpack.c.b16 %v669, %v668
      %v683 = vpack.c.b16 %v671, %v670
      %v684 = vpack.c.b16 %v673, %v672
      %v685 = vpack.c.b16 %v675, %v674
      %v686 = vpack.c.b16 %v677, %v676
      %v687 = vpack.c.b16 %v679, %v678
      %v690 = vunpack.c.l.b16 %v235
      %v691 = vunpack.c.l.b16 %v236
      %v692 = vpack.c.b16 %v691, %v690
      %v694 = vsel %vm332, %v680, 0
      %v697 = vsel %vm332, %v681, 0
      %v700 = vsel %vm332, %v682, 0
      %v703 = vsel %vm332, %v683, 0
      %v706 = vsel %vm332, %v684, 0
      %v709 = vsel %vm332, %v685, 0
      %v712 = vsel %vm332, %v686, 0
      %v715 = vsel %vm332, %v687, 0
      %v718 = vsel %vm357, %v692, 0
      %720 = vmatprep.subr.bf16.mxu0 0
      %721 = vmatpush1.bf16.msra.mxu0 0
      %722 = vmatprep.subr.bf16.mxu0 0
      %723 = vmatpush1.bf16.msra.mxu0 0
      %724 = vmatprep.subr.bf16.mxu0 0
      %725 = vmatpush1.bf16.msra.mxu0 0
      %726 = vmatprep.subr.bf16.mxu0 0
      %727 = vmatpush1.bf16.msra.mxu0 0
      %728 = vmatprep.subr.bf16.mxu0 0
      %729 = vmatpush1.bf16.msra.mxu0 0
      %730 = vmatprep.subr.bf16.mxu0 0
      %731 = vmatpush1.bf16.msra.mxu0 0
      %732 = vmatprep.subr.bf16.mxu0 0
      %733 = vmatpush1.bf16.msra.mxu0 0
      %734 = vmatprep.subr.bf16.mxu0 0
      %735 = vmatpush1.bf16.msra.mxu0 %v718
      %736 = vmatprep.subr.bf16.mxu0 0
      %737 = vmatpush2.bf16.msra.mxu0 0
      %738 = vmatprep.subr.bf16.mxu0 0
      %739 = vmatpush2.bf16.msra.mxu0 0
      %740 = vmatprep.subr.bf16.mxu0 0
      %741 = vmatpush2.bf16.msra.mxu0 0
      %742 = vmatprep.subr.bf16.mxu0 0
      %743 = vmatpush2.bf16.msra.mxu0 0
      %744 = vmatprep.subr.bf16.mxu0 0
      %745 = vmatpush2.bf16.msra.mxu0 0
      %746 = vmatprep.subr.bf16.mxu0 0
      %747 = vmatpush2.bf16.msra.mxu0 0
      %748 = vmatprep.subr.bf16.mxu0 0
      %749 = vmatpush2.bf16.msra.mxu0 0
      %750 = vmatprep.subr.bf16.mxu0 0
      %751 = vmatpush2.bf16.msra.mxu0 0
      %752 = vmatprep.mubr.bf16.mxu0 0
      %753 = vmatmul.mubr.bf16.gmra.mxu0 %v694
      %v754 = vpop.f32.mrf.mxu0
      %v755 = vadd.f32 0.0, %v754
      %v756 = vpop.f32.mrf.mxu0
      %v757 = vpop.f32.mrf.mxu0
      %v758 = vadd.f32 0.0, %v757
      %v759 = vpop.f32.mrf.mxu0
      %760 = vmatprep.mubr.bf16.mxu0 0
      %761 = vmatmul.mubr.bf16.gmra.mxu0 %v697
      %v762 = vpop.f32.mrf.mxu0
      %v763 = vadd.f32 0.0, %v762
      %v764 = vpop.f32.mrf.mxu0
      %v765 = vpop.f32.mrf.mxu0
      %v766 = vadd.f32 0.0, %v765
      %v767 = vpop.f32.mrf.mxu0
      %768 = vmatprep.mubr.bf16.mxu0 0
      %769 = vmatmul.mubr.bf16.gmra.mxu0 %v700
      %v770 = vpop.f32.mrf.mxu0
      %v771 = vadd.f32 0.0, %v770
      %v772 = vpop.f32.mrf.mxu0
      %v773 = vpop.f32.mrf.mxu0
      %v774 = vadd.f32 0.0, %v773
      %v775 = vpop.f32.mrf.mxu0
      %776 = vmatprep.mubr.bf16.mxu0 0
      %777 = vmatmul.mubr.bf16.gmra.mxu0 %v703
      %v778 = vpop.f32.mrf.mxu0
      %v779 = vadd.f32 0.0, %v778
      %v780 = vpop.f32.mrf.mxu0
      %v781 = vpop.f32.mrf.mxu0
      %v782 = vadd.f32 0.0, %v781
      %v783 = vpop.f32.mrf.mxu0
      %784 = vmatprep.mubr.bf16.mxu0 0
      %785 = vmatmul.mubr.bf16.gmra.mxu0 %v706
      %v786 = vpop.f32.mrf.mxu0
      %v787 = vadd.f32 0.0, %v786
      %v788 = vpop.f32.mrf.mxu0
      %v789 = vpop.f32.mrf.mxu0
      %v790 = vadd.f32 0.0, %v789
      %v791 = vpop.f32.mrf.mxu0
      %792 = vmatprep.mubr.bf16.mxu0 0
      %793 = vmatmul.mubr.bf16.gmra.mxu0 %v709
      %v794 = vpop.f32.mrf.mxu0
      %v795 = vadd.f32 0.0, %v794
      %v796 = vpop.f32.mrf.mxu0
      %v797 = vpop.f32.mrf.mxu0
      %v798 = vadd.f32 0.0, %v797
      %v799 = vpop.f32.mrf.mxu0
      %800 = vmatprep.mubr.bf16.mxu0 0
      %801 = vmatmul.mubr.bf16.gmra.mxu0 %v712
      %v802 = vpop.f32.mrf.mxu0
      %v803 = vadd.f32 0.0, %v802
      %v804 = vpop.f32.mrf.mxu0
      %v805 = vpop.f32.mrf.mxu0
      %v806 = vadd.f32 0.0, %v805
      %v807 = vpop.f32.mrf.mxu0
      %808 = vmatprep.mubr.bf16.mxu0 0
      %809 = vmatmul.mubr.bf16.gmra.mxu0 %v715
      %v810 = vpop.f32.mrf.mxu0
      %v811 = vadd.f32 0.0, %v810
      %v812 = vpop.f32.mrf.mxu0
      %v813 = vpop.f32.mrf.mxu0
      %v814 = vadd.f32 0.0, %v813
      %v815 = vpop.f32.mrf.mxu0
      %816 = vdwg.mxu0
      %v817 = vadd.f32 %v565, %v755
      %v818 = vadd.f32 %v568, %v758
      %v819 = vadd.f32 %v573, %v763
      %v820 = vadd.f32 %v576, %v766
      %v821 = vadd.f32 %v581, %v771
      %v822 = vadd.f32 %v584, %v774
      %v823 = vadd.f32 %v589, %v779
      %v824 = vadd.f32 %v592, %v782
      %v825 = vadd.f32 %v597, %v787
      %v826 = vadd.f32 %v600, %v790
      %v827 = vadd.f32 %v605, %v795
      %v828 = vadd.f32 %v608, %v798
      %v829 = vadd.f32 %v613, %v803
      %v830 = vadd.f32 %v616, %v806
      %v831 = vadd.f32 %v621, %v811
      %v832 = vadd.f32 %v624, %v814
      %v834 = vlaneseq
      %v835 = vshrl.u32 %v834, 7
      %v836 = vsub.s32 0, %v835
      %v837 = vrot.slane %v248, %v836
      %v839 = vadd.f32 %v817, %v837
      %v840 = vadd.f32 %v818, %v837
      %v841 = vadd.f32 %v819, %v837
      %v842 = vadd.f32 %v820, %v837
      %v843 = vadd.f32 %v821, %v837
      %v844 = vadd.f32 %v822, %v837
      %v845 = vadd.f32 %v823, %v837
      %v846 = vadd.f32 %v824, %v837
      %v847 = vadd.f32 %v825, %v837
      %v848 = vadd.f32 %v826, %v837
      %v849 = vadd.f32 %v827, %v837
      %v850 = vadd.f32 %v828, %v837
      %v851 = vadd.f32 %v829, %v837
      %v852 = vadd.f32 %v830, %v837
      %v853 = vadd.f32 %v831, %v837
      %v854 = vadd.f32 %v832, %v837
      %v855 = vmax.f32 %v839, 0.0
      %v856 = vmax.f32 %v840, 0.0
      %v857 = vmax.f32 %v841, 0.0
      %v858 = vmax.f32 %v842, 0.0
      %v859 = vmax.f32 %v843, 0.0
      %v860 = vmax.f32 %v844, 0.0
      %v861 = vmax.f32 %v845, 0.0
      %v862 = vmax.f32 %v846, 0.0
      %v863 = vmax.f32 %v847, 0.0
      %v864 = vmax.f32 %v848, 0.0
      %v865 = vmax.f32 %v849, 0.0
      %v866 = vmax.f32 %v850, 0.0
      %v867 = vmax.f32 %v851, 0.0
      %v868 = vmax.f32 %v852, 0.0
      %v869 = vmax.f32 %v853, 0.0
      %v870 = vmax.f32 %v854, 0.0
      %v871 = vpack.c.bf16 %v856, %v855
      %v872 = vpack.c.bf16 %v858, %v857
      %v873 = vpack.c.bf16 %v860, %v859
      %v874 = vpack.c.bf16 %v862, %v861
      %v875 = vpack.c.bf16 %v864, %v863
      %v876 = vpack.c.bf16 %v866, %v865
      %v877 = vpack.c.bf16 %v868, %v867
      %v878 = vpack.c.bf16 %v870, %v869
      %v887 = vunpack.c.l.b16 %v871
      %v888 = vunpack.c.h.b16 %v871
      %v889 = vunpack.c.l.b16 %v872
      %v890 = vunpack.c.h.b16 %v872
      %v891 = vunpack.c.l.b16 %v873
      %v892 = vunpack.c.h.b16 %v873
      %v893 = vunpack.c.l.b16 %v874
      %v894 = vunpack.c.h.b16 %v874
      %v895 = vunpack.c.l.b16 %v875
      %v896 = vunpack.c.h.b16 %v875
      %v897 = vunpack.c.l.b16 %v876
      %v898 = vunpack.c.h.b16 %v876
      %v899 = vunpack.c.l.b16 %v877
      %v900 = vunpack.c.h.b16 %v877
      %v901 = vunpack.c.l.b16 %v878
      %v902 = vunpack.c.h.b16 %v878
      %v903 = vpack.c.b16 %v887, %v887
      %v904 = vpack.c.b16 %v888, %v888
      %v905 = vpack.c.b16 %v889, %v889
      %v906 = vpack.c.b16 %v890, %v890
      %v907 = vpack.c.b16 %v891, %v891
      %v908 = vpack.c.b16 %v892, %v892
      %v909 = vpack.c.b16 %v893, %v893
      %v910 = vpack.c.b16 %v894, %v894
      %v911 = vpack.c.b16 %v895, %v895
      %v912 = vpack.c.b16 %v896, %v896
      %v913 = vpack.c.b16 %v897, %v897
      %v914 = vpack.c.b16 %v898, %v898
      %v915 = vpack.c.b16 %v899, %v899
      %v916 = vpack.c.b16 %v900, %v900
      %v917 = vpack.c.b16 %v901, %v901
      %v918 = vpack.c.b16 %v902, %v902
      %vm935 = vcmask 60416
      %936 = vst.msk [vmem:[#allocation2] sm:$0xf] %vm935, %v903
      %937 = vst.msk [vmem:[#allocation2 + $0x4] sm:$0xf] %vm935, %v904
      %938 = vst.msk [vmem:[#allocation2 + $0x8] sm:$0xf] %vm935, %v905
      %939 = vst.msk [vmem:[#allocation2 + $0xc] sm:$0xf] %vm935, %v906
      %940 = vst.msk [vmem:[#allocation2 + $0x10] sm:$0xf] %vm935, %v907
      %941 = vst.msk [vmem:[#allocation2 + $0x14] sm:$0xf] %vm935, %v908
      %942 = vst.msk [vmem:[#allocation2 + $0x18] sm:$0xf] %vm935, %v909
      %943 = vst.msk [vmem:[#allocation2 + $0x1c] sm:$0xf] %vm935, %v910
      %944 = vst.msk [vmem:[#allocation2 + $0x20] sm:$0xf] %vm935, %v911
      %945 = vst.msk [vmem:[#allocation2 + $0x24] sm:$0xf] %vm935, %v912
      %946 = vst.msk [vmem:[#allocation2 + $0x28] sm:$0xf] %vm935, %v913
      %947 = vst.msk [vmem:[#allocation2 + $0x2c] sm:$0xf] %vm935, %v914
      %948 = vst.msk [vmem:[#allocation2 + $0x30] sm:$0xf] %vm935, %v915
      %949 = vst.msk [vmem:[#allocation2 + $0x34] sm:$0xf] %vm935, %v916
      %950 = vst.msk [vmem:[#allocation2 + $0x38] sm:$0xf] %vm935, %v917
      %951 = vst.msk [vmem:[#allocation2 + $0x3c] sm:$0xf] %vm935, %v918
      %v952 = vld [vmem:[%s220 + $0x40] sm:$0xf]
      %v953 = vld [vmem:[%s220 + $0x44] sm:$0xf]
      %v954 = vld [vmem:[%s220 + $0x48] sm:$0xf]
      %v955 = vld [vmem:[%s220 + $0x4c] sm:$0xf]
      %v956 = vld [vmem:[%s220 + $0x50] sm:$0xf]
      %v957 = vld [vmem:[%s220 + $0x54] sm:$0xf]
      %v958 = vld [vmem:[%s220 + $0x58] sm:$0xf]
      %v959 = vld [vmem:[%s220 + $0x5c] sm:$0xf]
      %v960 = vld [vmem:[%s220 + $0x60] sm:$0xf]
      %v961 = vld [vmem:[%s220 + $0x64] sm:$0xf]
      %v962 = vld [vmem:[%s220 + $0x68] sm:$0xf]
      %v963 = vld [vmem:[%s220 + $0x6c] sm:$0x7]
      %v964 = vld [vmem:[%s220 + $0x6c] sm:$0xf]
      %v965 = vld [vmem:[%s220 + $0x70] sm:$0xf]
      %v966 = vld [vmem:[%s220 + $0x74] sm:$0x7]
      %v979 = vunpack.c.l.b16 %v954
      %v980 = vunpack.c.l.b16 %v955
      %v981 = vunpack.c.l.b16 %v956
      %v982 = vunpack.c.l.b16 %v957
      %v983 = vunpack.c.l.b16 %v958
      %v984 = vunpack.c.l.b16 %v959
      %v985 = vunpack.c.l.b16 %v960
      %v986 = vunpack.c.l.b16 %v961
      %v987 = vunpack.c.l.b16 %v962
      %v988 = vunpack.c.l.b16 %v964
      %v989 = vunpack.c.l.b16 %v965
      %v990 = vunpack.c.l.b16 %v966
      %v991 = vpack.c.b16 %v980, %v979
      %v992 = vpack.c.b16 %v982, %v981
      %v993 = vpack.c.b16 %v984, %v983
      %v994 = vpack.c.b16 %v986, %v985
      %v995 = vpack.c.b16 %v988, %v987
      %v996 = vpack.c.b16 %v990, %v989
      %v998 = vsel %vm332, %v991, 0
      %v1001 = vsel %vm332, %v992, 0
      %v1004 = vsel %vm332, %v993, 0
      %v1007 = vsel %vm332, %v994, 0
      %v1010 = vsel %vm332, %v995, 0
      %v1013 = vsel %vm332, %v996, 0
      %1015 = vmatprep.subr.bf16.mxu0 0
      %1016 = vmatpush1.bf16.msra.mxu0 0
      %1017 = vmatprep.subr.bf16.mxu0 0
      %1018 = vmatpush1.bf16.msra.mxu0 0
      %1019 = vmatprep.subr.bf16.mxu0 0
      %1020 = vmatpush1.bf16.msra.mxu0 0
      %1021 = vmatprep.subr.bf16.mxu0 0
      %1022 = vmatpush1.bf16.msra.mxu0 0
      %1023 = vmatprep.subr.bf16.mxu0 0
      %1024 = vmatpush1.bf16.msra.mxu0 0
      %1025 = vmatprep.subr.bf16.mxu0 0
      %1026 = vmatpush1.bf16.msra.mxu0 0
      %1027 = vmatprep.subr.bf16.mxu0 0
      %1028 = vmatpush1.bf16.msra.mxu0 0
      %1029 = vmatprep.subr.bf16.mxu0 0
      %1030 = vmatpush1.bf16.msra.mxu0 %v359
      %1031 = vmatprep.subr.bf16.mxu0 0
      %1032 = vmatpush2.bf16.msra.mxu0 0
      %1033 = vmatprep.subr.bf16.mxu0 0
      %1034 = vmatpush2.bf16.msra.mxu0 0
      %1035 = vmatprep.subr.bf16.mxu0 0
      %1036 = vmatpush2.bf16.msra.mxu0 0
      %1037 = vmatprep.subr.bf16.mxu0 0
      %1038 = vmatpush2.bf16.msra.mxu0 0
      %1039 = vmatprep.subr.bf16.mxu0 0
      %1040 = vmatpush2.bf16.msra.mxu0 0
      %1041 = vmatprep.subr.bf16.mxu0 0
      %1042 = vmatpush2.bf16.msra.mxu0 0
      %1043 = vmatprep.subr.bf16.mxu0 0
      %1044 = vmatpush2.bf16.msra.mxu0 0
      %1045 = vmatprep.subr.bf16.mxu0 0
      %1046 = vmatpush2.bf16.msra.mxu0 0
      %1047 = vmatprep.mubr.bf16.mxu0 0
      %1048 = vmatmul.mubr.bf16.gmra.mxu0 %v998
      %v1049 = vpop.f32.mrf.mxu0
      %v1050 = vadd.f32 0.0, %v1049
      %v1051 = vpop.f32.mrf.mxu0
      %v1052 = vpop.f32.mrf.mxu0
      %v1053 = vadd.f32 0.0, %v1052
      %v1054 = vpop.f32.mrf.mxu0
      %1055 = vmatprep.mubr.bf16.mxu0 0
      %1056 = vmatmul.mubr.bf16.gmra.mxu0 %v1001
      %v1057 = vpop.f32.mrf.mxu0
      %v1058 = vadd.f32 0.0, %v1057
      %v1059 = vpop.f32.mrf.mxu0
      %v1060 = vpop.f32.mrf.mxu0
      %v1061 = vadd.f32 0.0, %v1060
      %v1062 = vpop.f32.mrf.mxu0
      %1063 = vmatprep.mubr.bf16.mxu0 0
      %1064 = vmatmul.mubr.bf16.gmra.mxu0 %v1004
      %v1065 = vpop.f32.mrf.mxu0
      %v1066 = vadd.f32 0.0, %v1065
      %v1067 = vpop.f32.mrf.mxu0
      %v1068 = vpop.f32.mrf.mxu0
      %v1069 = vadd.f32 0.0, %v1068
      %v1070 = vpop.f32.mrf.mxu0
      %1071 = vmatprep.mubr.bf16.mxu0 0
      %1072 = vmatmul.mubr.bf16.gmra.mxu0 %v1007
      %v1073 = vpop.f32.mrf.mxu0
      %v1074 = vadd.f32 0.0, %v1073
      %v1075 = vpop.f32.mrf.mxu0
      %v1076 = vpop.f32.mrf.mxu0
      %v1077 = vadd.f32 0.0, %v1076
      %v1078 = vpop.f32.mrf.mxu0
      %1079 = vmatprep.mubr.bf16.mxu0 0
      %1080 = vmatmul.mubr.bf16.gmra.mxu0 %v1010
      %v1081 = vpop.f32.mrf.mxu0
      %v1082 = vadd.f32 0.0, %v1081
      %v1083 = vpop.f32.mrf.mxu0
      %v1084 = vpop.f32.mrf.mxu0
      %v1085 = vadd.f32 0.0, %v1084
      %v1086 = vpop.f32.mrf.mxu0
      %1087 = vmatprep.mubr.bf16.mxu0 0
      %1088 = vmatmul.mubr.bf16.gmra.mxu0 %v1013
      %v1089 = vpop.f32.mrf.mxu0
      %v1090 = vadd.f32 0.0, %v1089
      %v1091 = vpop.f32.mrf.mxu0
      %v1092 = vpop.f32.mrf.mxu0
      %v1093 = vadd.f32 0.0, %v1092
      %v1094 = vpop.f32.mrf.mxu0
      %1095 = vdwg.mxu0
      %v1099 = vunpack.c.l.b16 %v952
      %v1100 = vunpack.c.l.b16 %v953
      %v1101 = vunpack.c.l.b16 %v963
      %v1102 = vpack.c.b16 %v1100, %v1099
      %v1103 = vpack.c.b16 %v1101, %v987
      %v1105 = vsel %vm332, %v1102, 0
      %v1108 = vsel %vm332, %v1103, 0
      %1110 = vmatprep.subr.bf16.mxu0 0
      %1111 = vmatpush1.bf16.msra.mxu0 0
      %1112 = vmatprep.subr.bf16.mxu0 0
      %1113 = vmatpush1.bf16.msra.mxu0 0
      %1114 = vmatprep.subr.bf16.mxu0 0
      %1115 = vmatpush1.bf16.msra.mxu0 0
      %1116 = vmatprep.subr.bf16.mxu0 0
      %1117 = vmatpush1.bf16.msra.mxu0 0
      %1118 = vmatprep.subr.bf16.mxu0 0
      %1119 = vmatpush1.bf16.msra.mxu0 0
      %1120 = vmatprep.subr.bf16.mxu0 0
      %1121 = vmatpush1.bf16.msra.mxu0 0
      %1122 = vmatprep.subr.bf16.mxu0 0
      %1123 = vmatpush1.bf16.msra.mxu0 0
      %1124 = vmatprep.subr.bf16.mxu0 0
      %1125 = vmatpush1.bf16.msra.mxu0 %v528
      %1126 = vmatprep.subr.bf16.mxu0 0
      %1127 = vmatpush2.bf16.msra.mxu0 0
      %1128 = vmatprep.subr.bf16.mxu0 0
      %1129 = vmatpush2.bf16.msra.mxu0 0
      %1130 = vmatprep.subr.bf16.mxu0 0
      %1131 = vmatpush2.bf16.msra.mxu0 0
      %1132 = vmatprep.subr.bf16.mxu0 0
      %1133 = vmatpush2.bf16.msra.mxu0 0
      %1134 = vmatprep.subr.bf16.mxu0 0
      %1135 = vmatpush2.bf16.msra.mxu0 0
      %1136 = vmatprep.subr.bf16.mxu0 0
      %1137 = vmatpush2.bf16.msra.mxu0 0
      %1138 = vmatprep.subr.bf16.mxu0 0
      %1139 = vmatpush2.bf16.msra.mxu0 0
      %1140 = vmatprep.subr.bf16.mxu0 0
      %1141 = vmatpush2.bf16.msra.mxu0 0
      %1142 = vmatprep.mubr.bf16.mxu0 0
      %1143 = vmatmul.mubr.bf16.gmra.mxu0 %v1105
      %v1144 = vpop.f32.mrf.mxu0
      %v1145 = vadd.f32 %v1050, %v1144
      %v1146 = vpop.f32.mrf.mxu0
      %v1147 = vpop.f32.mrf.mxu0
      %v1148 = vadd.f32 %v1053, %v1147
      %v1149 = vpop.f32.mrf.mxu0
      %1150 = vmatprep.mubr.bf16.mxu0 0
      %1151 = vmatmul.mubr.bf16.gmra.mxu0 %v998
      %v1152 = vpop.f32.mrf.mxu0
      %v1153 = vadd.f32 %v1058, %v1152
      %v1154 = vpop.f32.mrf.mxu0
      %v1155 = vpop.f32.mrf.mxu0
      %v1156 = vadd.f32 %v1061, %v1155
      %v1157 = vpop.f32.mrf.mxu0
      %1158 = vmatprep.mubr.bf16.mxu0 0
      %1159 = vmatmul.mubr.bf16.gmra.mxu0 %v1001
      %v1160 = vpop.f32.mrf.mxu0
      %v1161 = vadd.f32 %v1066, %v1160
      %v1162 = vpop.f32.mrf.mxu0
      %v1163 = vpop.f32.mrf.mxu0
      %v1164 = vadd.f32 %v1069, %v1163
      %v1165 = vpop.f32.mrf.mxu0
      %1166 = vmatprep.mubr.bf16.mxu0 0
      %1167 = vmatmul.mubr.bf16.gmra.mxu0 %v1004
      %v1168 = vpop.f32.mrf.mxu0
      %v1169 = vadd.f32 %v1074, %v1168
      %v1170 = vpop.f32.mrf.mxu0
      %v1171 = vpop.f32.mrf.mxu0
      %v1172 = vadd.f32 %v1077, %v1171
      %v1173 = vpop.f32.mrf.mxu0
      %1174 = vmatprep.mubr.bf16.mxu0 0
      %1175 = vmatmul.mubr.bf16.gmra.mxu0 %v1007
      %v1176 = vpop.f32.mrf.mxu0
      %v1177 = vadd.f32 %v1082, %v1176
      %v1178 = vpop.f32.mrf.mxu0
      %v1179 = vpop.f32.mrf.mxu0
      %v1180 = vadd.f32 %v1085, %v1179
      %v1181 = vpop.f32.mrf.mxu0
      %1182 = vmatprep.mubr.bf16.mxu0 0
      %1183 = vmatmul.mubr.bf16.gmra.mxu0 %v1108
      %v1184 = vpop.f32.mrf.mxu0
      %v1185 = vadd.f32 %v1090, %v1184
      %v1186 = vpop.f32.mrf.mxu0
      %v1187 = vpop.f32.mrf.mxu0
      %v1188 = vadd.f32 %v1093, %v1187
      %v1189 = vpop.f32.mrf.mxu0
      %1190 = vdwg.mxu0
      %v1191 = vld [vmem:[%s220 + $0x50] sm:$0xf]
      %v1192 = vld [vmem:[%s220 + $0x54] sm:$0xf]
      %v1193 = vld [vmem:[%s220 + $0x58] sm:$0xf]
      %v1194 = vld [vmem:[%s220 + $0x5c] sm:$0xf]
      %v1195 = vld [vmem:[%s220 + $0x60] sm:$0xf]
      %v1196 = vld [vmem:[%s220 + $0x64] sm:$0xf]
      %v1197 = vld [vmem:[%s220 + $0x68] sm:$0xf]
      %v1198 = vld [vmem:[%s220 + $0x6c] sm:$0xf]
      %v1199 = vld [vmem:[%s220 + $0x70] sm:$0xf]
      %v1200 = vld [vmem:[%s220 + $0x74] sm:$0xf]
      %v1201 = vld [vmem:[%s220 + $0x78] sm:$0xf]
      %v1202 = vld [vmem:[%s220 + $0x7c] sm:$0x7]
      %v1215 = vunpack.c.l.b16 %v1191
      %v1216 = vunpack.c.l.b16 %v1192
      %v1217 = vunpack.c.l.b16 %v1193
      %v1218 = vunpack.c.l.b16 %v1194
      %v1219 = vunpack.c.l.b16 %v1195
      %v1220 = vunpack.c.l.b16 %v1196
      %v1221 = vunpack.c.l.b16 %v1197
      %v1222 = vunpack.c.l.b16 %v1198
      %v1223 = vunpack.c.l.b16 %v1199
      %v1224 = vunpack.c.l.b16 %v1200
      %v1225 = vunpack.c.l.b16 %v1201
      %v1226 = vunpack.c.l.b16 %v1202
      %v1227 = vpack.c.b16 %v1216, %v1215
      %v1228 = vpack.c.b16 %v1218, %v1217
      %v1229 = vpack.c.b16 %v1220, %v1219
      %v1230 = vpack.c.b16 %v1222, %v1221
      %v1231 = vpack.c.b16 %v1224, %v1223
      %v1232 = vpack.c.b16 %v1226, %v1225
      %v1234 = vsel %vm332, %v1227, 0
      %v1237 = vsel %vm332, %v1228, 0
      %v1240 = vsel %vm332, %v1229, 0
      %v1243 = vsel %vm332, %v1230, 0
      %v1246 = vsel %vm332, %v1231, 0
      %v1249 = vsel %vm332, %v1232, 0
      %1251 = vmatprep.subr.bf16.mxu0 0
      %1252 = vmatpush1.bf16.msra.mxu0 0
      %1253 = vmatprep.subr.bf16.mxu0 0
      %1254 = vmatpush1.bf16.msra.mxu0 0
      %1255 = vmatprep.subr.bf16.mxu0 0
      %1256 = vmatpush1.bf16.msra.mxu0 0
      %1257 = vmatprep.subr.bf16.mxu0 0
      %1258 = vmatpush1.bf16.msra.mxu0 0
      %1259 = vmatprep.subr.bf16.mxu0 0
      %1260 = vmatpush1.bf16.msra.mxu0 0
      %1261 = vmatprep.subr.bf16.mxu0 0
      %1262 = vmatpush1.bf16.msra.mxu0 0
      %1263 = vmatprep.subr.bf16.mxu0 0
      %1264 = vmatpush1.bf16.msra.mxu0 0
      %1265 = vmatprep.subr.bf16.mxu0 0
      %1266 = vmatpush1.bf16.msra.mxu0 %v718
      %1267 = vmatprep.subr.bf16.mxu0 0
      %1268 = vmatpush2.bf16.msra.mxu0 0
      %1269 = vmatprep.subr.bf16.mxu0 0
      %1270 = vmatpush2.bf16.msra.mxu0 0
      %1271 = vmatprep.subr.bf16.mxu0 0
      %1272 = vmatpush2.bf16.msra.mxu0 0
      %1273 = vmatprep.subr.bf16.mxu0 0
      %1274 = vmatpush2.bf16.msra.mxu0 0
      %1275 = vmatprep.subr.bf16.mxu0 0
      %1276 = vmatpush2.bf16.msra.mxu0 0
      %1277 = vmatprep.subr.bf16.mxu0 0
      %1278 = vmatpush2.bf16.msra.mxu0 0
      %1279 = vmatprep.subr.bf16.mxu0 0
      %1280 = vmatpush2.bf16.msra.mxu0 0
      %1281 = vmatprep.subr.bf16.mxu0 0
      %1282 = vmatpush2.bf16.msra.mxu0 0
      %1283 = vmatprep.mubr.bf16.mxu0 0
      %1284 = vmatmul.mubr.bf16.gmra.mxu0 %v1234
      %v1285 = vpop.f32.mrf.mxu0
      %v1286 = vadd.f32 0.0, %v1285
      %v1287 = vpop.f32.mrf.mxu0
      %v1288 = vpop.f32.mrf.mxu0
      %v1289 = vadd.f32 0.0, %v1288
      %v1290 = vpop.f32.mrf.mxu0
      %1291 = vmatprep.mubr.bf16.mxu0 0
      %1292 = vmatmul.mubr.bf16.gmra.mxu0 %v1237
      %v1293 = vpop.f32.mrf.mxu0
      %v1294 = vadd.f32 0.0, %v1293
      %v1295 = vpop.f32.mrf.mxu0
      %v1296 = vpop.f32.mrf.mxu0
      %v1297 = vadd.f32 0.0, %v1296
      %v1298 = vpop.f32.mrf.mxu0
      %1299 = vmatprep.mubr.bf16.mxu0 0
      %1300 = vmatmul.mubr.bf16.gmra.mxu0 %v1240
      %v1301 = vpop.f32.mrf.mxu0
      %v1302 = vadd.f32 0.0, %v1301
      %v1303 = vpop.f32.mrf.mxu0
      %v1304 = vpop.f32.mrf.mxu0
      %v1305 = vadd.f32 0.0, %v1304
      %v1306 = vpop.f32.mrf.mxu0
      %1307 = vmatprep.mubr.bf16.mxu0 0
      %1308 = vmatmul.mubr.bf16.gmra.mxu0 %v1243
      %v1309 = vpop.f32.mrf.mxu0
      %v1310 = vadd.f32 0.0, %v1309
      %v1311 = vpop.f32.mrf.mxu0
      %v1312 = vpop.f32.mrf.mxu0
      %v1313 = vadd.f32 0.0, %v1312
      %v1314 = vpop.f32.mrf.mxu0
      %1315 = vmatprep.mubr.bf16.mxu0 0
      %1316 = vmatmul.mubr.bf16.gmra.mxu0 %v1246
      %v1317 = vpop.f32.mrf.mxu0
      %v1318 = vadd.f32 0.0, %v1317
      %v1319 = vpop.f32.mrf.mxu0
      %v1320 = vpop.f32.mrf.mxu0
      %v1321 = vadd.f32 0.0, %v1320
      %v1322 = vpop.f32.mrf.mxu0
      %1323 = vmatprep.mubr.bf16.mxu0 0
      %1324 = vmatmul.mubr.bf16.gmra.mxu0 %v1249
      %v1325 = vpop.f32.mrf.mxu0
      %v1326 = vadd.f32 0.0, %v1325
      %v1327 = vpop.f32.mrf.mxu0
      %v1328 = vpop.f32.mrf.mxu0
      %v1329 = vadd.f32 0.0, %v1328
      %v1330 = vpop.f32.mrf.mxu0
      %1331 = vdwg.mxu0
      %v1332 = vadd.f32 %v1145, %v1286
      %v1333 = vadd.f32 %v1148, %v1289
      %v1334 = vadd.f32 %v1153, %v1294
      %v1335 = vadd.f32 %v1156, %v1297
      %v1336 = vadd.f32 %v1161, %v1302
      %v1337 = vadd.f32 %v1164, %v1305
      %v1338 = vadd.f32 %v1169, %v1310
      %v1339 = vadd.f32 %v1172, %v1313
      %v1340 = vadd.f32 %v1177, %v1318
      %v1341 = vadd.f32 %v1180, %v1321
      %v1342 = vadd.f32 %v1185, %v1326
      %v1343 = vadd.f32 %v1188, %v1329
      %v1344 = vadd.f32 %v1332, %v837
      %v1345 = vadd.f32 %v1333, %v837
      %v1346 = vadd.f32 %v1334, %v837
      %v1347 = vadd.f32 %v1335, %v837
      %v1348 = vadd.f32 %v1336, %v837
      %v1349 = vadd.f32 %v1337, %v837
      %v1350 = vadd.f32 %v1338, %v837
      %v1351 = vadd.f32 %v1339, %v837
      %v1352 = vadd.f32 %v1340, %v837
      %v1353 = vadd.f32 %v1341, %v837
      %v1354 = vadd.f32 %v1342, %v837
      %v1355 = vadd.f32 %v1343, %v837
      %v1356 = vmax.f32 %v1344, 0.0
      %v1357 = vmax.f32 %v1345, 0.0
      %v1358 = vmax.f32 %v1346, 0.0
      %v1359 = vmax.f32 %v1347, 0.0
      %v1360 = vmax.f32 %v1348, 0.0
      %v1361 = vmax.f32 %v1349, 0.0
      %v1362 = vmax.f32 %v1350, 0.0
      %v1363 = vmax.f32 %v1351, 0.0
      %v1364 = vmax.f32 %v1352, 0.0
      %v1365 = vmax.f32 %v1353, 0.0
      %v1366 = vmax.f32 %v1354, 0.0
      %v1367 = vmax.f32 %v1355, 0.0
      %v1368 = vpack.c.bf16 %v1357, %v1356
      %v1369 = vpack.c.bf16 %v1359, %v1358
      %v1370 = vpack.c.bf16 %v1361, %v1360
      %v1371 = vpack.c.bf16 %v1363, %v1362
      %v1372 = vpack.c.bf16 %v1365, %v1364
      %v1373 = vpack.c.bf16 %v1367, %v1366
      %v1380 = vunpack.c.l.b16 %v1368
      %v1381 = vunpack.c.h.b16 %v1368
      %v1382 = vunpack.c.l.b16 %v1369
      %v1383 = vunpack.c.h.b16 %v1369
      %v1384 = vunpack.c.l.b16 %v1370
      %v1385 = vunpack.c.h.b16 %v1370
      %v1386 = vunpack.c.l.b16 %v1371
      %v1387 = vunpack.c.h.b16 %v1371
      %v1388 = vunpack.c.l.b16 %v1372
      %v1389 = vunpack.c.h.b16 %v1372
      %v1390 = vunpack.c.l.b16 %v1373
      %v1391 = vunpack.c.h.b16 %v1373
      %v1392 = vpack.c.b16 %v1380, %v1380
      %v1393 = vpack.c.b16 %v1381, %v1381
      %v1394 = vpack.c.b16 %v1382, %v1382
      %v1395 = vpack.c.b16 %v1383, %v1383
      %v1396 = vpack.c.b16 %v1384, %v1384
      %v1397 = vpack.c.b16 %v1385, %v1385
      %v1398 = vpack.c.b16 %v1386, %v1386
      %v1399 = vpack.c.b16 %v1387, %v1387
      %v1400 = vpack.c.b16 %v1388, %v1388
      %v1401 = vpack.c.b16 %v1389, %v1389
      %v1402 = vpack.c.b16 %v1390, %v1390
      %v1403 = vpack.c.b16 %v1391, %v1391
      %1416 = vst.msk [vmem:[#allocation2 + $0x40] sm:$0xf] %vm935, %v1392
      %1417 = vst.msk [vmem:[#allocation2 + $0x44] sm:$0xf] %vm935, %v1393
      %1418 = vst.msk [vmem:[#allocation2 + $0x48] sm:$0xf] %vm935, %v1394
      %1419 = vst.msk [vmem:[#allocation2 + $0x4c] sm:$0xf] %vm935, %v1395
      %1420 = vst.msk [vmem:[#allocation2 + $0x50] sm:$0xf] %vm935, %v1396
      %1421 = vst.msk [vmem:[#allocation2 + $0x54] sm:$0xf] %vm935, %v1397
      %1422 = vst.msk [vmem:[#allocation2 + $0x58] sm:$0xf] %vm935, %v1398
      %1423 = vst.msk [vmem:[#allocation2 + $0x5c] sm:$0xf] %vm935, %v1399
      %1424 = vst.msk [vmem:[#allocation2 + $0x60] sm:$0xf] %vm935, %v1400
      %1425 = vst.msk [vmem:[#allocation2 + $0x64] sm:$0xf] %vm935, %v1401
      %1426 = vst.msk [vmem:[#allocation2 + $0x68] sm:$0xf] %vm935, %v1402
      %vm1427 = vcmask 59392
      %1428 = vst.msk [vmem:[#allocation2 + $0x6c] sm:$0x7] %vm1427, %v1403
      %v1429 = vld [vmem:[#allocation2] sm:$0xf]
      %v1430 = vld [vmem:[#allocation2 + $0x4] sm:$0xf]
      %v1431 = vld [vmem:[#allocation2 + $0x8] sm:$0xf]
      %v1432 = vld [vmem:[#allocation2 + $0xc] sm:$0xf]
      %v1433 = vld [vmem:[#allocation2 + $0x10] sm:$0xf]
      %v1434 = vld [vmem:[#allocation2 + $0x14] sm:$0xf]
      %v1435 = vld [vmem:[#allocation2 + $0x18] sm:$0xf]
      %v1436 = vld [vmem:[#allocation2 + $0x1c] sm:$0xf]
      %v1437 = vld [vmem:[#allocation2 + $0x20] sm:$0xf]
      %v1438 = vld [vmem:[#allocation2 + $0x24] sm:$0xf]
      %v1439 = vld [vmem:[#allocation2 + $0x28] sm:$0xf]
      %v1440 = vld [vmem:[#allocation2 + $0x2c] sm:$0xf]
      %v1441 = vld [vmem:[#allocation2 + $0x30] sm:$0xf]
      %v1442 = vld [vmem:[#allocation2 + $0x34] sm:$0xf]
      %v1443 = vld [vmem:[#allocation2 + $0x38] sm:$0xf]
      %v1444 = vld [vmem:[#allocation2 + $0x3c] sm:$0xf]
      %v1445 = vld [vmem:[#allocation2 + $0x40] sm:$0x1]
      %v1462 = vunpack.c.l.b16 %v1429
      %v1463 = vunpack.c.l.b16 %v1430
      %v1464 = vunpack.c.l.b16 %v1431
      %v1465 = vunpack.c.l.b16 %v1432
      %v1466 = vunpack.c.l.b16 %v1433
      %v1467 = vunpack.c.l.b16 %v1434
      %v1468 = vunpack.c.l.b16 %v1435
      %v1469 = vunpack.c.l.b16 %v1436
      %v1470 = vunpack.c.l.b16 %v1437
      %v1471 = vunpack.c.l.b16 %v1438
      %v1472 = vunpack.c.l.b16 %v1439
      %v1473 = vunpack.c.l.b16 %v1440
      %v1474 = vunpack.c.l.b16 %v1441
      %v1475 = vunpack.c.l.b16 %v1442
      %v1476 = vunpack.c.l.b16 %v1443
      %v1477 = vunpack.c.l.b16 %v1444
      %v1478 = vpack.c.b16 %v1463, %v1462
      %v1479 = vpack.c.b16 %v1465, %v1464
      %v1480 = vpack.c.b16 %v1467, %v1466
      %v1481 = vpack.c.b16 %v1469, %v1468
      %v1482 = vpack.c.b16 %v1471, %v1470
      %v1483 = vpack.c.b16 %v1473, %v1472
      %v1484 = vpack.c.b16 %v1475, %v1474
      %v1485 = vpack.c.b16 %v1477, %v1476
      %v1487 = vunpack.c.l.b16 %v1445
      %v1488 = vpack.c.b16 %v1487, %v1487
      %vm1489 = vsmask.f32 7424
      %v1491 = vshrl.u32 %v1478, 16
      %v1493 = vshll.u32 %v1478, 16
      %v1495 = vrot.slane %v1493, 1
      %v1496 = vor.u32 %v1491, %v1495
      %v1498 = vshll.u32 %v1479, 16
      %v1500 = vrot.slane %v1498, 1
      %v1501 = vsel %vm1489, %v1496, %v1500
      %v1502 = vshrl.u32 %v1479, 16
      %v1504 = vor.u32 %v1502, %v1500
      %v1506 = vshll.u32 %v1480, 16
      %v1508 = vrot.slane %v1506, 1
      %v1509 = vsel %vm1489, %v1504, %v1508
      %v1510 = vshrl.u32 %v1480, 16
      %v1512 = vor.u32 %v1510, %v1508
      %v1514 = vshll.u32 %v1481, 16
      %v1516 = vrot.slane %v1514, 1
      %v1517 = vsel %vm1489, %v1512, %v1516
      %v1518 = vshrl.u32 %v1481, 16
      %v1520 = vor.u32 %v1518, %v1516
      %v1522 = vshll.u32 %v1482, 16
      %v1524 = vrot.slane %v1522, 1
      %v1525 = vsel %vm1489, %v1520, %v1524
      %v1526 = vshrl.u32 %v1482, 16
      %v1528 = vor.u32 %v1526, %v1524
      %v1530 = vshll.u32 %v1483, 16
      %v1532 = vrot.slane %v1530, 1
      %v1533 = vsel %vm1489, %v1528, %v1532
      %v1534 = vshrl.u32 %v1483, 16
      %v1536 = vor.u32 %v1534, %v1532
      %v1538 = vshll.u32 %v1484, 16
      %v1540 = vrot.slane %v1538, 1
      %v1541 = vsel %vm1489, %v1536, %v1540
      %v1542 = vshrl.u32 %v1484, 16
      %v1544 = vor.u32 %v1542, %v1540
      %v1546 = vshll.u32 %v1485, 16
      %v1548 = vrot.slane %v1546, 1
      %v1549 = vsel %vm1489, %v1544, %v1548
      %v1550 = vshrl.u32 %v1485, 16
      %v1552 = vor.u32 %v1550, %v1548
      %v1554 = vshll.u32 %v1488, 16
      %v1556 = vrot.slane %v1554, 1
      %v1557 = vsel %vm1489, %v1552, %v1556
      %1558 = vrot.lane.b32.xlu0 %v1501, 8
      %v1559 = vpop.permute.xlu0 %1558
      %1560 = vrot.lane.b32.xlu0 %v1509, 8
      %v1561 = vpop.permute.xlu0 %1560
      %1562 = vrot.lane.b32.xlu0 %v1517, 8
      %v1563 = vpop.permute.xlu0 %1562
      %1564 = vrot.lane.b32.xlu0 %v1525, 8
      %v1565 = vpop.permute.xlu0 %1564
      %1566 = vrot.lane.b32.xlu0 %v1533, 8
      %v1567 = vpop.permute.xlu0 %1566
      %1568 = vrot.lane.b32.xlu0 %v1541, 8
      %v1569 = vpop.permute.xlu0 %1568
      %1570 = vrot.lane.b32.xlu0 %v1549, 8
      %v1571 = vpop.permute.xlu0 %1570
      %1572 = vrot.lane.b32.xlu0 %v1557, 8
      %v1573 = vpop.permute.xlu0 %1572
      %vm1574 = vcmask 1046528
      %v1575 = vrot.slane %v1478, 1
      %v1576 = vrot.slane %v1479, 1
      %v1577 = vsel %vm1574, %v1575, %v1576
      %v1578 = vrot.slane %v1480, 1
      %v1579 = vsel %vm1574, %v1576, %v1578
      %v1580 = vrot.slane %v1481, 1
      %v1581 = vsel %vm1574, %v1578, %v1580
      %v1582 = vrot.slane %v1482, 1
      %v1583 = vsel %vm1574, %v1580, %v1582
      %v1584 = vrot.slane %v1483, 1
      %v1585 = vsel %vm1574, %v1582, %v1584
      %v1586 = vrot.slane %v1484, 1
      %v1587 = vsel %vm1574, %v1584, %v1586
      %v1588 = vrot.slane %v1485, 1
      %v1589 = vsel %vm1574, %v1586, %v1588
      %v1590 = vrot.slane %v1488, 1
      %v1591 = vsel %vm1574, %v1588, %v1590
      %1592 = vrot.lane.b32.xlu0 %v1577, 16
      %v1593 = vpop.permute.xlu0 %1592
      %1594 = vrot.lane.b32.xlu0 %v1579, 16
      %v1595 = vpop.permute.xlu0 %1594
      %1596 = vrot.lane.b32.xlu0 %v1581, 16
      %v1597 = vpop.permute.xlu0 %1596
      %1598 = vrot.lane.b32.xlu0 %v1583, 16
      %v1599 = vpop.permute.xlu0 %1598
      %1600 = vrot.lane.b32.xlu0 %v1585, 16
      %v1601 = vpop.permute.xlu0 %1600
      %1602 = vrot.lane.b32.xlu0 %v1587, 16
      %v1603 = vpop.permute.xlu0 %1602
      %1604 = vrot.lane.b32.xlu0 %v1589, 16
      %v1605 = vpop.permute.xlu0 %1604
      %1606 = vrot.lane.b32.xlu0 %v1591, 16
      %v1607 = vpop.permute.xlu0 %1606
      %vm1608 = vcmask 64512
      %v1610 = vsel %vm1608, %v1478, %v1559
      %v1612 = vsel %vm1608, %v1479, %v1561
      %v1614 = vsel %vm1608, %v1480, %v1563
      %v1616 = vsel %vm1608, %v1481, %v1565
      %v1618 = vsel %vm1608, %v1482, %v1567
      %v1620 = vsel %vm1608, %v1483, %v1569
      %v1622 = vsel %vm1608, %v1484, %v1571
      %v1624 = vsel %vm1608, %v1485, %v1573
      %vm1625 = vcmask 130048
      %v1627 = vsel %vm1625, %v1610, %v1593
      %v1629 = vsel %vm1625, %v1612, %v1595
      %v1631 = vsel %vm1625, %v1614, %v1597
      %v1633 = vsel %vm1625, %v1616, %v1599
      %v1635 = vsel %vm1625, %v1618, %v1601
      %v1637 = vsel %vm1625, %v1620, %v1603
      %v1639 = vsel %vm1625, %v1622, %v1605
      %v1641 = vsel %vm1625, %v1624, %v1607
      %s1642 = smul.addr %s267, 4
      %s1643 = scalar_lea.vmem [#allocation2], %s1642
      %v1644 = vld [vmem:[%s1643] sm:$0xf]
      %v1645 = vld [vmem:[%s1643 + $0x4] sm:$0xf]
      %v1646 = vld [vmem:[%s1643 + $0x8] sm:$0xf]
      %v1647 = vld [vmem:[%s1643 + $0xc] sm:$0xf]
      %v1648 = vld [vmem:[%s1643 + $0x10] sm:$0xf]
      %v1649 = vld [vmem:[%s1643 + $0x14] sm:$0xf]
      %v1650 = vld [vmem:[%s1643 + $0x18] sm:$0xf]
      %v1651 = vld [vmem:[%s1643 + $0x1c] sm:$0xf]
      %v1652 = vld [vmem:[%s1643 + $0x20] sm:$0xf]
      %v1653 = vld [vmem:[%s1643 + $0x24] sm:$0xf]
      %v1654 = vld [vmem:[%s1643 + $0x28] sm:$0xf]
      %v1655 = vld [vmem:[%s1643 + $0x2c] sm:$0xf]
      %v1656 = vld [vmem:[%s1643 + $0x30] sm:$0xf]
      %v1657 = vld [vmem:[%s1643 + $0x34] sm:$0xf]
      %v1658 = vld [vmem:[%s1643 + $0x38] sm:$0xf]
      %v1659 = vld [vmem:[%s1643 + $0x3c] sm:$0xf]
      %v1660 = vld [vmem:[%s1643 + $0x40] sm:$0x1]
      %v1677 = vunpack.c.l.b16 %v1644
      %v1678 = vunpack.c.l.b16 %v1645
      %v1679 = vunpack.c.l.b16 %v1646
      %v1680 = vunpack.c.l.b16 %v1647
      %v1681 = vunpack.c.l.b16 %v1648
      %v1682 = vunpack.c.l.b16 %v1649
      %v1683 = vunpack.c.l.b16 %v1650
      %v1684 = vunpack.c.l.b16 %v1651
      %v1685 = vunpack.c.l.b16 %v1652
      %v1686 = vunpack.c.l.b16 %v1653
      %v1687 = vunpack.c.l.b16 %v1654
      %v1688 = vunpack.c.l.b16 %v1655
      %v1689 = vunpack.c.l.b16 %v1656
      %v1690 = vunpack.c.l.b16 %v1657
      %v1691 = vunpack.c.l.b16 %v1658
      %v1692 = vunpack.c.l.b16 %v1659
      %v1693 = vpack.c.b16 %v1678, %v1677
      %v1694 = vpack.c.b16 %v1680, %v1679
      %v1695 = vpack.c.b16 %v1682, %v1681
      %v1696 = vpack.c.b16 %v1684, %v1683
      %v1697 = vpack.c.b16 %v1686, %v1685
      %v1698 = vpack.c.b16 %v1688, %v1687
      %v1699 = vpack.c.b16 %v1690, %v1689
      %v1700 = vpack.c.b16 %v1692, %v1691
      %v1702 = vunpack.c.l.b16 %v1660
      %v1703 = vpack.c.b16 %v1702, %v1702
      %v1705 = vshrl.u32 %v1693, 16
      %v1707 = vshll.u32 %v1693, 16
      %v1709 = vrot.slane %v1707, 1
      %v1710 = vor.u32 %v1705, %v1709
      %v1712 = vshll.u32 %v1694, 16
      %v1714 = vrot.slane %v1712, 1
      %v1715 = vsel %vm1489, %v1710, %v1714
      %v1716 = vshrl.u32 %v1694, 16
      %v1718 = vor.u32 %v1716, %v1714
      %v1720 = vshll.u32 %v1695, 16
      %v1722 = vrot.slane %v1720, 1
      %v1723 = vsel %vm1489, %v1718, %v1722
      %v1724 = vshrl.u32 %v1695, 16
      %v1726 = vor.u32 %v1724, %v1722
      %v1728 = vshll.u32 %v1696, 16
      %v1730 = vrot.slane %v1728, 1
      %v1731 = vsel %vm1489, %v1726, %v1730
      %v1732 = vshrl.u32 %v1696, 16
      %v1734 = vor.u32 %v1732, %v1730
      %v1736 = vshll.u32 %v1697, 16
      %v1738 = vrot.slane %v1736, 1
      %v1739 = vsel %vm1489, %v1734, %v1738
      %v1740 = vshrl.u32 %v1697, 16
      %v1742 = vor.u32 %v1740, %v1738
      %v1744 = vshll.u32 %v1698, 16
      %v1746 = vrot.slane %v1744, 1
      %v1747 = vsel %vm1489, %v1742, %v1746
      %v1748 = vshrl.u32 %v1698, 16
      %v1750 = vor.u32 %v1748, %v1746
      %v1752 = vshll.u32 %v1699, 16
      %v1754 = vrot.slane %v1752, 1
      %v1755 = vsel %vm1489, %v1750, %v1754
      %v1756 = vshrl.u32 %v1699, 16
      %v1758 = vor.u32 %v1756, %v1754
      %v1760 = vshll.u32 %v1700, 16
      %v1762 = vrot.slane %v1760, 1
      %v1763 = vsel %vm1489, %v1758, %v1762
      %v1764 = vshrl.u32 %v1700, 16
      %v1766 = vor.u32 %v1764, %v1762
      %v1768 = vshll.u32 %v1703, 16
      %v1770 = vrot.slane %v1768, 1
      %v1771 = vsel %vm1489, %v1766, %v1770
      %1772 = vrot.lane.b32.xlu0 %v1715, 8
      %v1773 = vpop.permute.xlu0 %1772
      %1774 = vrot.lane.b32.xlu0 %v1723, 8
      %v1775 = vpop.permute.xlu0 %1774
      %1776 = vrot.lane.b32.xlu0 %v1731, 8
      %v1777 = vpop.permute.xlu0 %1776
      %1778 = vrot.lane.b32.xlu0 %v1739, 8
      %v1779 = vpop.permute.xlu0 %1778
      %1780 = vrot.lane.b32.xlu0 %v1747, 8
      %v1781 = vpop.permute.xlu0 %1780
      %1782 = vrot.lane.b32.xlu0 %v1755, 8
      %v1783 = vpop.permute.xlu0 %1782
      %1784 = vrot.lane.b32.xlu0 %v1763, 8
      %v1785 = vpop.permute.xlu0 %1784
      %1786 = vrot.lane.b32.xlu0 %v1771, 8
      %v1787 = vpop.permute.xlu0 %1786
      %v1788 = vrot.slane %v1693, 1
      %v1789 = vrot.slane %v1694, 1
      %v1790 = vsel %vm1574, %v1788, %v1789
      %v1791 = vrot.slane %v1695, 1
      %v1792 = vsel %vm1574, %v1789, %v1791
      %v1793 = vrot.slane %v1696, 1
      %v1794 = vsel %vm1574, %v1791, %v1793
      %v1795 = vrot.slane %v1697, 1
      %v1796 = vsel %vm1574, %v1793, %v1795
      %v1797 = vrot.slane %v1698, 1
      %v1798 = vsel %vm1574, %v1795, %v1797
      %v1799 = vrot.slane %v1699, 1
      %v1800 = vsel %vm1574, %v1797, %v1799
      %v1801 = vrot.slane %v1700, 1
      %v1802 = vsel %vm1574, %v1799, %v1801
      %v1803 = vrot.slane %v1703, 1
      %v1804 = vsel %vm1574, %v1801, %v1803
      %1805 = vrot.lane.b32.xlu0 %v1790, 16
      %v1806 = vpop.permute.xlu0 %1805
      %1807 = vrot.lane.b32.xlu0 %v1792, 16
      %v1808 = vpop.permute.xlu0 %1807
      %1809 = vrot.lane.b32.xlu0 %v1794, 16
      %v1810 = vpop.permute.xlu0 %1809
      %1811 = vrot.lane.b32.xlu0 %v1796, 16
      %v1812 = vpop.permute.xlu0 %1811
      %1813 = vrot.lane.b32.xlu0 %v1798, 16
      %v1814 = vpop.permute.xlu0 %1813
      %1815 = vrot.lane.b32.xlu0 %v1800, 16
      %v1816 = vpop.permute.xlu0 %1815
      %1817 = vrot.lane.b32.xlu0 %v1802, 16
      %v1818 = vpop.permute.xlu0 %1817
      %1819 = vrot.lane.b32.xlu0 %v1804, 16
      %v1820 = vpop.permute.xlu0 %1819
      %v1822 = vsel %vm1608, %v1693, %v1773
      %v1824 = vsel %vm1608, %v1694, %v1775
      %v1826 = vsel %vm1608, %v1695, %v1777
      %v1828 = vsel %vm1608, %v1696, %v1779
      %v1830 = vsel %vm1608, %v1697, %v1781
      %v1832 = vsel %vm1608, %v1698, %v1783
      %v1834 = vsel %vm1608, %v1699, %v1785
      %v1836 = vsel %vm1608, %v1700, %v1787
      %v1838 = vsel %vm1625, %v1822, %v1806
      %v1840 = vsel %vm1625, %v1824, %v1808
      %v1842 = vsel %vm1625, %v1826, %v1810
      %v1844 = vsel %vm1625, %v1828, %v1812
      %v1846 = vsel %vm1625, %v1830, %v1814
      %v1848 = vsel %vm1625, %v1832, %v1816
      %v1850 = vsel %vm1625, %v1834, %v1818
      %v1852 = vsel %vm1625, %v1836, %v1820
      %v1856 = vunpack.c.l.b16 %v241
      %v1857 = vunpack.c.l.b16 %v242
      %v1858 = vunpack.c.l.b16 %v243
      %v1859 = vpack.c.b16 %v1857, %v1856
      %v1860 = vpack.c.b16 %v1858, %v1858
      %vm1862 = vcmask 195584
      %v1863 = vsel %vm1862, %v1838, 0
      %v1865 = vsel %vm1862, %v1840, 0
      %v1867 = vsel %vm1862, %v1842, 0
      %v1869 = vsel %vm1862, %v1844, 0
      %v1871 = vsel %vm1862, %v1846, 0
      %v1873 = vsel %vm1862, %v1848, 0
      %v1875 = vsel %vm1862, %v1850, 0
      %v1877 = vsel %vm1862, %v1852, 0
      %vm1879 = vcmask 1043456
      %v1881 = vsel %vm1879, %v1860, 0
      %1883 = vmatprep.subr.bf16.mxu0 0
      %1884 = vmatpush1.bf16.msra.mxu0 0
      %1885 = vmatprep.subr.bf16.mxu0 0
      %1886 = vmatpush1.bf16.msra.mxu0 0
      %1887 = vmatprep.subr.bf16.mxu0 0
      %1888 = vmatpush1.bf16.msra.mxu0 0
      %1889 = vmatprep.subr.bf16.mxu0 0
      %1890 = vmatpush1.bf16.msra.mxu0 0
      %1891 = vmatprep.subr.bf16.mxu0 0
      %1892 = vmatpush1.bf16.msra.mxu0 0
      %1893 = vmatprep.subr.bf16.mxu0 0
      %1894 = vmatpush1.bf16.msra.mxu0 0
      %1895 = vmatprep.subr.bf16.mxu0 0
      %1896 = vmatpush1.bf16.msra.mxu0 %v1881
      %1897 = vmatprep.subr.bf16.mxu0 0
      %1898 = vmatpush1.bf16.msra.mxu0 %v1859
      %1899 = vmatprep.subr.bf16.mxu0 0
      %1900 = vmatpush2.bf16.msra.mxu0 0
      %1901 = vmatprep.subr.bf16.mxu0 0
      %1902 = vmatpush2.bf16.msra.mxu0 0
      %1903 = vmatprep.subr.bf16.mxu0 0
      %1904 = vmatpush2.bf16.msra.mxu0 0
      %1905 = vmatprep.subr.bf16.mxu0 0
      %1906 = vmatpush2.bf16.msra.mxu0 0
      %1907 = vmatprep.subr.bf16.mxu0 0
      %1908 = vmatpush2.bf16.msra.mxu0 0
      %1909 = vmatprep.subr.bf16.mxu0 0
      %1910 = vmatpush2.bf16.msra.mxu0 0
      %1911 = vmatprep.subr.bf16.mxu0 0
      %1912 = vmatpush2.bf16.msra.mxu0 0
      %1913 = vmatprep.subr.bf16.mxu0 0
      %1914 = vmatpush2.bf16.msra.mxu0 0
      %1915 = vmatprep.mubr.bf16.mxu0 0
      %1916 = vmatmul.mubr.bf16.gmra.mxu0 %v1863
      %v1917 = vpop.f32.mrf.mxu0
      %v1918 = vadd.f32 0.0, %v1917
      %v1919 = vpop.f32.mrf.mxu0
      %v1920 = vpop.f32.mrf.mxu0
      %v1921 = vadd.f32 0.0, %v1920
      %v1922 = vpop.f32.mrf.mxu0
      %1923 = vmatprep.mubr.bf16.mxu0 0
      %1924 = vmatmul.mubr.bf16.gmra.mxu0 %v1865
      %v1925 = vpop.f32.mrf.mxu0
      %v1926 = vadd.f32 0.0, %v1925
      %v1927 = vpop.f32.mrf.mxu0
      %v1928 = vpop.f32.mrf.mxu0
      %v1929 = vadd.f32 0.0, %v1928
      %v1930 = vpop.f32.mrf.mxu0
      %1931 = vmatprep.mubr.bf16.mxu0 0
      %1932 = vmatmul.mubr.bf16.gmra.mxu0 %v1867
      %v1933 = vpop.f32.mrf.mxu0
      %v1934 = vadd.f32 0.0, %v1933
      %v1935 = vpop.f32.mrf.mxu0
      %v1936 = vpop.f32.mrf.mxu0
      %v1937 = vadd.f32 0.0, %v1936
      %v1938 = vpop.f32.mrf.mxu0
      %1939 = vmatprep.mubr.bf16.mxu0 0
      %1940 = vmatmul.mubr.bf16.gmra.mxu0 %v1869
      %v1941 = vpop.f32.mrf.mxu0
      %v1942 = vadd.f32 0.0, %v1941
      %v1943 = vpop.f32.mrf.mxu0
      %v1944 = vpop.f32.mrf.mxu0
      %v1945 = vadd.f32 0.0, %v1944
      %v1946 = vpop.f32.mrf.mxu0
      %1947 = vmatprep.mubr.bf16.mxu0 0
      %1948 = vmatmul.mubr.bf16.gmra.mxu0 %v1871
      %v1949 = vpop.f32.mrf.mxu0
      %v1950 = vadd.f32 0.0, %v1949
      %v1951 = vpop.f32.mrf.mxu0
      %v1952 = vpop.f32.mrf.mxu0
      %v1953 = vadd.f32 0.0, %v1952
      %v1954 = vpop.f32.mrf.mxu0
      %1955 = vmatprep.mubr.bf16.mxu0 0
      %1956 = vmatmul.mubr.bf16.gmra.mxu0 %v1873
      %v1957 = vpop.f32.mrf.mxu0
      %v1958 = vadd.f32 0.0, %v1957
      %v1959 = vpop.f32.mrf.mxu0
      %v1960 = vpop.f32.mrf.mxu0
      %v1961 = vadd.f32 0.0, %v1960
      %v1962 = vpop.f32.mrf.mxu0
      %1963 = vmatprep.mubr.bf16.mxu0 0
      %1964 = vmatmul.mubr.bf16.gmra.mxu0 %v1875
      %v1965 = vpop.f32.mrf.mxu0
      %v1966 = vadd.f32 0.0, %v1965
      %v1967 = vpop.f32.mrf.mxu0
      %v1968 = vpop.f32.mrf.mxu0
      %v1969 = vadd.f32 0.0, %v1968
      %v1970 = vpop.f32.mrf.mxu0
      %1971 = vmatprep.mubr.bf16.mxu0 0
      %1972 = vmatmul.mubr.bf16.gmra.mxu0 %v1877
      %v1973 = vpop.f32.mrf.mxu0
      %v1974 = vadd.f32 0.0, %v1973
      %v1975 = vpop.f32.mrf.mxu0
      %v1976 = vpop.f32.mrf.mxu0
      %v1977 = vadd.f32 0.0, %v1976
      %v1978 = vpop.f32.mrf.mxu0
      %1979 = vdwg.mxu0
      %v1983 = vunpack.c.l.b16 %v237
      %v1984 = vunpack.c.l.b16 %v238
      %v1985 = vunpack.c.l.b16 %v239
      %v1986 = vpack.c.b16 %v1984, %v1983
      %v1987 = vpack.c.b16 %v1985, %v1985
      %v1989 = vsel %vm1862, %v1627, 0
      %v1991 = vsel %vm1862, %v1629, 0
      %v1993 = vsel %vm1862, %v1631, 0
      %v1995 = vsel %vm1862, %v1633, 0
      %v1997 = vsel %vm1862, %v1635, 0
      %v1999 = vsel %vm1862, %v1637, 0
      %v2001 = vsel %vm1862, %v1639, 0
      %v2003 = vsel %vm1862, %v1641, 0
      %v2006 = vsel %vm1879, %v1987, 0
      %2008 = vmatprep.subr.bf16.mxu0 0
      %2009 = vmatpush1.bf16.msra.mxu0 0
      %2010 = vmatprep.subr.bf16.mxu0 0
      %2011 = vmatpush1.bf16.msra.mxu0 0
      %2012 = vmatprep.subr.bf16.mxu0 0
      %2013 = vmatpush1.bf16.msra.mxu0 0
      %2014 = vmatprep.subr.bf16.mxu0 0
      %2015 = vmatpush1.bf16.msra.mxu0 0
      %2016 = vmatprep.subr.bf16.mxu0 0
      %2017 = vmatpush1.bf16.msra.mxu0 0
      %2018 = vmatprep.subr.bf16.mxu0 0
      %2019 = vmatpush1.bf16.msra.mxu0 0
      %2020 = vmatprep.subr.bf16.mxu0 0
      %2021 = vmatpush1.bf16.msra.mxu0 %v2006
      %2022 = vmatprep.subr.bf16.mxu0 0
      %2023 = vmatpush1.bf16.msra.mxu0 %v1986
      %2024 = vmatprep.subr.bf16.mxu0 0
      %2025 = vmatpush2.bf16.msra.mxu0 0
      %2026 = vmatprep.subr.bf16.mxu0 0
      %2027 = vmatpush2.bf16.msra.mxu0 0
      %2028 = vmatprep.subr.bf16.mxu0 0
      %2029 = vmatpush2.bf16.msra.mxu0 0
      %2030 = vmatprep.subr.bf16.mxu0 0
      %2031 = vmatpush2.bf16.msra.mxu0 0
      %2032 = vmatprep.subr.bf16.mxu0 0
      %2033 = vmatpush2.bf16.msra.mxu0 0
      %2034 = vmatprep.subr.bf16.mxu0 0
      %2035 = vmatpush2.bf16.msra.mxu0 0
      %2036 = vmatprep.subr.bf16.mxu0 0
      %2037 = vmatpush2.bf16.msra.mxu0 0
      %2038 = vmatprep.subr.bf16.mxu0 0
      %2039 = vmatpush2.bf16.msra.mxu0 0
      %2040 = vmatprep.mubr.bf16.mxu0 0
      %2041 = vmatmul.mubr.bf16.gmra.mxu0 %v1989
      %v2042 = vpop.f32.mrf.mxu0
      %v2043 = vadd.f32 %v1918, %v2042
      %v2044 = vpop.f32.mrf.mxu0
      %v2045 = vpop.f32.mrf.mxu0
      %v2046 = vadd.f32 %v1921, %v2045
      %v2047 = vpop.f32.mrf.mxu0
      %2048 = vmatprep.mubr.bf16.mxu0 0
      %2049 = vmatmul.mubr.bf16.gmra.mxu0 %v1991
      %v2050 = vpop.f32.mrf.mxu0
      %v2051 = vadd.f32 %v1926, %v2050
      %v2052 = vpop.f32.mrf.mxu0
      %v2053 = vpop.f32.mrf.mxu0
      %v2054 = vadd.f32 %v1929, %v2053
      %v2055 = vpop.f32.mrf.mxu0
      %2056 = vmatprep.mubr.bf16.mxu0 0
      %2057 = vmatmul.mubr.bf16.gmra.mxu0 %v1993
      %v2058 = vpop.f32.mrf.mxu0
      %v2059 = vadd.f32 %v1934, %v2058
      %v2060 = vpop.f32.mrf.mxu0
      %v2061 = vpop.f32.mrf.mxu0
      %v2062 = vadd.f32 %v1937, %v2061
      %v2063 = vpop.f32.mrf.mxu0
      %2064 = vmatprep.mubr.bf16.mxu0 0
      %2065 = vmatmul.mubr.bf16.gmra.mxu0 %v1995
      %v2066 = vpop.f32.mrf.mxu0
      %v2067 = vadd.f32 %v1942, %v2066
      %v2068 = vpop.f32.mrf.mxu0
      %v2069 = vpop.f32.mrf.mxu0
      %v2070 = vadd.f32 %v1945, %v2069
      %v2071 = vpop.f32.mrf.mxu0
      %2072 = vmatprep.mubr.bf16.mxu0 0
      %2073 = vmatmul.mubr.bf16.gmra.mxu0 %v1997
      %v2074 = vpop.f32.mrf.mxu0
      %v2075 = vadd.f32 %v1950, %v2074
      %v2076 = vpop.f32.mrf.mxu0
      %v2077 = vpop.f32.mrf.mxu0
      %v2078 = vadd.f32 %v1953, %v2077
      %v2079 = vpop.f32.mrf.mxu0
      %2080 = vmatprep.mubr.bf16.mxu0 0
      %2081 = vmatmul.mubr.bf16.gmra.mxu0 %v1999
      %v2082 = vpop.f32.mrf.mxu0
      %v2083 = vadd.f32 %v1958, %v2082
      %v2084 = vpop.f32.mrf.mxu0
      %v2085 = vpop.f32.mrf.mxu0
      %v2086 = vadd.f32 %v1961, %v2085
      %v2087 = vpop.f32.mrf.mxu0
      %2088 = vmatprep.mubr.bf16.mxu0 0
      %2089 = vmatmul.mubr.bf16.gmra.mxu0 %v2001
      %v2090 = vpop.f32.mrf.mxu0
      %v2091 = vadd.f32 %v1966, %v2090
      %v2092 = vpop.f32.mrf.mxu0
      %v2093 = vpop.f32.mrf.mxu0
      %v2094 = vadd.f32 %v1969, %v2093
      %v2095 = vpop.f32.mrf.mxu0
      %2096 = vmatprep.mubr.bf16.mxu0 0
      %2097 = vmatmul.mubr.bf16.gmra.mxu0 %v2003
      %v2098 = vpop.f32.mrf.mxu0
      %v2099 = vadd.f32 %v1974, %v2098
      %v2100 = vpop.f32.mrf.mxu0
      %v2101 = vpop.f32.mrf.mxu0
      %v2102 = vadd.f32 %v1977, %v2101
      %v2103 = vpop.f32.mrf.mxu0
      %2104 = vdwg.mxu0
      %s2105 = smul.addr %s628, 4
      %s2106 = scalar_lea.vmem [#allocation2], %s2105
      %v2107 = vld [vmem:[%s2106] sm:$0xf]
      %v2108 = vld [vmem:[%s2106 + $0x4] sm:$0xf]
      %v2109 = vld [vmem:[%s2106 + $0x8] sm:$0xf]
      %v2110 = vld [vmem:[%s2106 + $0xc] sm:$0xf]
      %v2111 = vld [vmem:[%s2106 + $0x10] sm:$0xf]
      %v2112 = vld [vmem:[%s2106 + $0x14] sm:$0xf]
      %v2113 = vld [vmem:[%s2106 + $0x18] sm:$0xf]
      %v2114 = vld [vmem:[%s2106 + $0x1c] sm:$0xf]
      %v2115 = vld [vmem:[%s2106 + $0x20] sm:$0xf]
      %v2116 = vld [vmem:[%s2106 + $0x24] sm:$0xf]
      %v2117 = vld [vmem:[%s2106 + $0x28] sm:$0xf]
      %v2118 = vld [vmem:[%s2106 + $0x2c] sm:$0xf]
      %v2119 = vld [vmem:[%s2106 + $0x30] sm:$0xf]
      %v2120 = vld [vmem:[%s2106 + $0x34] sm:$0xf]
      %v2121 = vld [vmem:[%s2106 + $0x38] sm:$0xf]
      %v2122 = vld [vmem:[%s2106 + $0x3c] sm:$0xf]
      %v2123 = vld [vmem:[%s2106 + $0x40] sm:$0x1]
      %v2140 = vunpack.c.l.b16 %v2107
      %v2141 = vunpack.c.l.b16 %v2108
      %v2142 = vunpack.c.l.b16 %v2109
      %v2143 = vunpack.c.l.b16 %v2110
      %v2144 = vunpack.c.l.b16 %v2111
      %v2145 = vunpack.c.l.b16 %v2112
      %v2146 = vunpack.c.l.b16 %v2113
      %v2147 = vunpack.c.l.b16 %v2114
      %v2148 = vunpack.c.l.b16 %v2115
      %v2149 = vunpack.c.l.b16 %v2116
      %v2150 = vunpack.c.l.b16 %v2117
      %v2151 = vunpack.c.l.b16 %v2118
      %v2152 = vunpack.c.l.b16 %v2119
      %v2153 = vunpack.c.l.b16 %v2120
      %v2154 = vunpack.c.l.b16 %v2121
      %v2155 = vunpack.c.l.b16 %v2122
      %v2156 = vpack.c.b16 %v2141, %v2140
      %v2157 = vpack.c.b16 %v2143, %v2142
      %v2158 = vpack.c.b16 %v2145, %v2144
      %v2159 = vpack.c.b16 %v2147, %v2146
      %v2160 = vpack.c.b16 %v2149, %v2148
      %v2161 = vpack.c.b16 %v2151, %v2150
      %v2162 = vpack.c.b16 %v2153, %v2152
      %v2163 = vpack.c.b16 %v2155, %v2154
      %v2165 = vunpack.c.l.b16 %v2123
      %v2166 = vpack.c.b16 %v2165, %v2165
      %v2168 = vshrl.u32 %v2156, 16
      %v2170 = vshll.u32 %v2156, 16
      %v2172 = vrot.slane %v2170, 1
      %v2173 = vor.u32 %v2168, %v2172
      %v2175 = vshll.u32 %v2157, 16
      %v2177 = vrot.slane %v2175, 1
      %v2178 = vsel %vm1489, %v2173, %v2177
      %v2179 = vshrl.u32 %v2157, 16
      %v2181 = vor.u32 %v2179, %v2177
      %v2183 = vshll.u32 %v2158, 16
      %v2185 = vrot.slane %v2183, 1
      %v2186 = vsel %vm1489, %v2181, %v2185
      %v2187 = vshrl.u32 %v2158, 16
      %v2189 = vor.u32 %v2187, %v2185
      %v2191 = vshll.u32 %v2159, 16
      %v2193 = vrot.slane %v2191, 1
      %v2194 = vsel %vm1489, %v2189, %v2193
      %v2195 = vshrl.u32 %v2159, 16
      %v2197 = vor.u32 %v2195, %v2193
      %v2199 = vshll.u32 %v2160, 16
      %v2201 = vrot.slane %v2199, 1
      %v2202 = vsel %vm1489, %v2197, %v2201
      %v2203 = vshrl.u32 %v2160, 16
      %v2205 = vor.u32 %v2203, %v2201
      %v2207 = vshll.u32 %v2161, 16
      %v2209 = vrot.slane %v2207, 1
      %v2210 = vsel %vm1489, %v2205, %v2209
      %v2211 = vshrl.u32 %v2161, 16
      %v2213 = vor.u32 %v2211, %v2209
      %v2215 = vshll.u32 %v2162, 16
      %v2217 = vrot.slane %v2215, 1
      %v2218 = vsel %vm1489, %v2213, %v2217
      %v2219 = vshrl.u32 %v2162, 16
      %v2221 = vor.u32 %v2219, %v2217
      %v2223 = vshll.u32 %v2163, 16
      %v2225 = vrot.slane %v2223, 1
      %v2226 = vsel %vm1489, %v2221, %v2225
      %v2227 = vshrl.u32 %v2163, 16
      %v2229 = vor.u32 %v2227, %v2225
      %v2231 = vshll.u32 %v2166, 16
      %v2233 = vrot.slane %v2231, 1
      %v2234 = vsel %vm1489, %v2229, %v2233
      %2235 = vrot.lane.b32.xlu0 %v2178, 8
      %v2236 = vpop.permute.xlu0 %2235
      %2237 = vrot.lane.b32.xlu0 %v2186, 8
      %v2238 = vpop.permute.xlu0 %2237
      %2239 = vrot.lane.b32.xlu0 %v2194, 8
      %v2240 = vpop.permute.xlu0 %2239
      %2241 = vrot.lane.b32.xlu0 %v2202, 8
      %v2242 = vpop.permute.xlu0 %2241
      %2243 = vrot.lane.b32.xlu0 %v2210, 8
      %v2244 = vpop.permute.xlu0 %2243
      %2245 = vrot.lane.b32.xlu0 %v2218, 8
      %v2246 = vpop.permute.xlu0 %2245
      %2247 = vrot.lane.b32.xlu0 %v2226, 8
      %v2248 = vpop.permute.xlu0 %2247
      %2249 = vrot.lane.b32.xlu0 %v2234, 8
      %v2250 = vpop.permute.xlu0 %2249
      %v2251 = vrot.slane %v2156, 1
      %v2252 = vrot.slane %v2157, 1
      %v2253 = vsel %vm1574, %v2251, %v2252
      %v2254 = vrot.slane %v2158, 1
      %v2255 = vsel %vm1574, %v2252, %v2254
      %v2256 = vrot.slane %v2159, 1
      %v2257 = vsel %vm1574, %v2254, %v2256
      %v2258 = vrot.slane %v2160, 1
      %v2259 = vsel %vm1574, %v2256, %v2258
      %v2260 = vrot.slane %v2161, 1
      %v2261 = vsel %vm1574, %v2258, %v2260
      %v2262 = vrot.slane %v2162, 1
      %v2263 = vsel %vm1574, %v2260, %v2262
      %v2264 = vrot.slane %v2163, 1
      %v2265 = vsel %vm1574, %v2262, %v2264
      %v2266 = vrot.slane %v2166, 1
      %v2267 = vsel %vm1574, %v2264, %v2266
      %2268 = vrot.lane.b32.xlu0 %v2253, 16
      %v2269 = vpop.permute.xlu0 %2268
      %2270 = vrot.lane.b32.xlu0 %v2255, 16
      %v2271 = vpop.permute.xlu0 %2270
      %2272 = vrot.lane.b32.xlu0 %v2257, 16
      %v2273 = vpop.permute.xlu0 %2272
      %2274 = vrot.lane.b32.xlu0 %v2259, 16
      %v2275 = vpop.permute.xlu0 %2274
      %2276 = vrot.lane.b32.xlu0 %v2261, 16
      %v2277 = vpop.permute.xlu0 %2276
      %2278 = vrot.lane.b32.xlu0 %v2263, 16
      %v2279 = vpop.permute.xlu0 %2278
      %2280 = vrot.lane.b32.xlu0 %v2265, 16
      %v2281 = vpop.permute.xlu0 %2280
      %2282 = vrot.lane.b32.xlu0 %v2267, 16
      %v2283 = vpop.permute.xlu0 %2282
      %v2285 = vsel %vm1608, %v2156, %v2236
      %v2287 = vsel %vm1608, %v2157, %v2238
      %v2289 = vsel %vm1608, %v2158, %v2240
      %v2291 = vsel %vm1608, %v2159, %v2242
      %v2293 = vsel %vm1608, %v2160, %v2244
      %v2295 = vsel %vm1608, %v2161, %v2246
      %v2297 = vsel %vm1608, %v2162, %v2248
      %v2299 = vsel %vm1608, %v2163, %v2250
      %v2301 = vsel %vm1625, %v2285, %v2269
      %v2303 = vsel %vm1625, %v2287, %v2271
      %v2305 = vsel %vm1625, %v2289, %v2273
      %v2307 = vsel %vm1625, %v2291, %v2275
      %v2309 = vsel %vm1625, %v2293, %v2277
      %v2311 = vsel %vm1625, %v2295, %v2279
      %v2313 = vsel %vm1625, %v2297, %v2281
      %v2315 = vsel %vm1625, %v2299, %v2283
      %v2319 = vunpack.c.l.b16 %v245
      %v2320 = vunpack.c.l.b16 %v246
      %v2321 = vunpack.c.l.b16 %v247
      %v2322 = vpack.c.b16 %v2320, %v2319
      %v2323 = vpack.c.b16 %v2321, %v2321
      %v2325 = vsel %vm1862, %v2301, 0
      %v2327 = vsel %vm1862, %v2303, 0
      %v2329 = vsel %vm1862, %v2305, 0
      %v2331 = vsel %vm1862, %v2307, 0
      %v2333 = vsel %vm1862, %v2309, 0
      %v2335 = vsel %vm1862, %v2311, 0
      %v2337 = vsel %vm1862, %v2313, 0
      %v2339 = vsel %vm1862, %v2315, 0
      %v2342 = vsel %vm1879, %v2323, 0
      %2344 = vmatprep.subr.bf16.mxu0 0
      %2345 = vmatpush1.bf16.msra.mxu0 0
      %2346 = vmatprep.subr.bf16.mxu0 0
      %2347 = vmatpush1.bf16.msra.mxu0 0
      %2348 = vmatprep.subr.bf16.mxu0 0
      %2349 = vmatpush1.bf16.msra.mxu0 0
      %2350 = vmatprep.subr.bf16.mxu0 0
      %2351 = vmatpush1.bf16.msra.mxu0 0
      %2352 = vmatprep.subr.bf16.mxu0 0
      %2353 = vmatpush1.bf16.msra.mxu0 0
      %2354 = vmatprep.subr.bf16.mxu0 0
      %2355 = vmatpush1.bf16.msra.mxu0 0
      %2356 = vmatprep.subr.bf16.mxu0 0
      %2357 = vmatpush1.bf16.msra.mxu0 %v2342
      %2358 = vmatprep.subr.bf16.mxu0 0
      %2359 = vmatpush1.bf16.msra.mxu0 %v2322
      %2360 = vmatprep.subr.bf16.mxu0 0
      %2361 = vmatpush2.bf16.msra.mxu0 0
      %2362 = vmatprep.subr.bf16.mxu0 0
      %2363 = vmatpush2.bf16.msra.mxu0 0
      %2364 = vmatprep.subr.bf16.mxu0 0
      %2365 = vmatpush2.bf16.msra.mxu0 0
      %2366 = vmatprep.subr.bf16.mxu0 0
      %2367 = vmatpush2.bf16.msra.mxu0 0
      %2368 = vmatprep.subr.bf16.mxu0 0
      %2369 = vmatpush2.bf16.msra.mxu0 0
      %2370 = vmatprep.subr.bf16.mxu0 0
      %2371 = vmatpush2.bf16.msra.mxu0 0
      %2372 = vmatprep.subr.bf16.mxu0 0
      %2373 = vmatpush2.bf16.msra.mxu0 0
      %2374 = vmatprep.subr.bf16.mxu0 0
      %2375 = vmatpush2.bf16.msra.mxu0 0
      %2376 = vmatprep.mubr.bf16.mxu0 0
      %2377 = vmatmul.mubr.bf16.gmra.mxu0 %v2325
      %v2378 = vpop.f32.mrf.mxu0
      %v2379 = vadd.f32 0.0, %v2378
      %v2380 = vpop.f32.mrf.mxu0
      %v2381 = vpop.f32.mrf.mxu0
      %v2382 = vadd.f32 0.0, %v2381
      %v2383 = vpop.f32.mrf.mxu0
      %2384 = vmatprep.mubr.bf16.mxu0 0
      %2385 = vmatmul.mubr.bf16.gmra.mxu0 %v2327
      %v2386 = vpop.f32.mrf.mxu0
      %v2387 = vadd.f32 0.0, %v2386
      %v2388 = vpop.f32.mrf.mxu0
      %v2389 = vpop.f32.mrf.mxu0
      %v2390 = vadd.f32 0.0, %v2389
      %v2391 = vpop.f32.mrf.mxu0
      %2392 = vmatprep.mubr.bf16.mxu0 0
      %2393 = vmatmul.mubr.bf16.gmra.mxu0 %v2329
      %v2394 = vpop.f32.mrf.mxu0
      %v2395 = vadd.f32 0.0, %v2394
      %v2396 = vpop.f32.mrf.mxu0
      %v2397 = vpop.f32.mrf.mxu0
      %v2398 = vadd.f32 0.0, %v2397
      %v2399 = vpop.f32.mrf.mxu0
      %2400 = vmatprep.mubr.bf16.mxu0 0
      %2401 = vmatmul.mubr.bf16.gmra.mxu0 %v2331
      %v2402 = vpop.f32.mrf.mxu0
      %v2403 = vadd.f32 0.0, %v2402
      %v2404 = vpop.f32.mrf.mxu0
      %v2405 = vpop.f32.mrf.mxu0
      %v2406 = vadd.f32 0.0, %v2405
      %v2407 = vpop.f32.mrf.mxu0
      %2408 = vmatprep.mubr.bf16.mxu0 0
      %2409 = vmatmul.mubr.bf16.gmra.mxu0 %v2333
      %v2410 = vpop.f32.mrf.mxu0
      %v2411 = vadd.f32 0.0, %v2410
      %v2412 = vpop.f32.mrf.mxu0
      %v2413 = vpop.f32.mrf.mxu0
      %v2414 = vadd.f32 0.0, %v2413
      %v2415 = vpop.f32.mrf.mxu0
      %2416 = vmatprep.mubr.bf16.mxu0 0
      %2417 = vmatmul.mubr.bf16.gmra.mxu0 %v2335
      %v2418 = vpop.f32.mrf.mxu0
      %v2419 = vadd.f32 0.0, %v2418
      %v2420 = vpop.f32.mrf.mxu0
      %v2421 = vpop.f32.mrf.mxu0
      %v2422 = vadd.f32 0.0, %v2421
      %v2423 = vpop.f32.mrf.mxu0
      %2424 = vmatprep.mubr.bf16.mxu0 0
      %2425 = vmatmul.mubr.bf16.gmra.mxu0 %v2337
      %v2426 = vpop.f32.mrf.mxu0
      %v2427 = vadd.f32 0.0, %v2426
      %v2428 = vpop.f32.mrf.mxu0
      %v2429 = vpop.f32.mrf.mxu0
      %v2430 = vadd.f32 0.0, %v2429
      %v2431 = vpop.f32.mrf.mxu0
      %2432 = vmatprep.mubr.bf16.mxu0 0
      %2433 = vmatmul.mubr.bf16.gmra.mxu0 %v2339
      %v2434 = vpop.f32.mrf.mxu0
      %v2435 = vadd.f32 0.0, %v2434
      %v2436 = vpop.f32.mrf.mxu0
      %v2437 = vpop.f32.mrf.mxu0
      %v2438 = vadd.f32 0.0, %v2437
      %v2439 = vpop.f32.mrf.mxu0
      %2440 = vdwg.mxu0
      %v2441 = vadd.f32 %v2043, %v2379
      %v2442 = vadd.f32 %v2046, %v2382
      %v2443 = vadd.f32 %v2051, %v2387
      %v2444 = vadd.f32 %v2054, %v2390
      %v2445 = vadd.f32 %v2059, %v2395
      %v2446 = vadd.f32 %v2062, %v2398
      %v2447 = vadd.f32 %v2067, %v2403
      %v2448 = vadd.f32 %v2070, %v2406
      %v2449 = vadd.f32 %v2075, %v2411
      %v2450 = vadd.f32 %v2078, %v2414
      %v2451 = vadd.f32 %v2083, %v2419
      %v2452 = vadd.f32 %v2086, %v2422
      %v2453 = vadd.f32 %v2091, %v2427
      %v2454 = vadd.f32 %v2094, %v2430
      %v2455 = vadd.f32 %v2099, %v2435
      %v2456 = vadd.f32 %v2102, %v2438
      %v2458 = vlaneseq
      %v2459 = vshrl.u32 %v2458, 7
      %v2460 = vsub.s32 0, %v2459
      %v2461 = vrot.slane %v249, %v2460
      %v2463 = vadd.f32 %v2441, %v2461
      %v2464 = vadd.f32 %v2442, %v2461
      %v2465 = vadd.f32 %v2443, %v2461
      %v2466 = vadd.f32 %v2444, %v2461
      %v2467 = vadd.f32 %v2445, %v2461
      %v2468 = vadd.f32 %v2446, %v2461
      %v2469 = vadd.f32 %v2447, %v2461
      %v2470 = vadd.f32 %v2448, %v2461
      %v2471 = vadd.f32 %v2449, %v2461
      %v2472 = vadd.f32 %v2450, %v2461
      %v2473 = vadd.f32 %v2451, %v2461
      %v2474 = vadd.f32 %v2452, %v2461
      %v2475 = vadd.f32 %v2453, %v2461
      %v2476 = vadd.f32 %v2454, %v2461
      %v2477 = vadd.f32 %v2455, %v2461
      %v2478 = vadd.f32 %v2456, %v2461
      %v2479 = vmax.f32 %v2463, 0.0
      %v2480 = vmax.f32 %v2464, 0.0
      %v2481 = vmax.f32 %v2465, 0.0
      %v2482 = vmax.f32 %v2466, 0.0
      %v2483 = vmax.f32 %v2467, 0.0
      %v2484 = vmax.f32 %v2468, 0.0
      %v2485 = vmax.f32 %v2469, 0.0
      %v2486 = vmax.f32 %v2470, 0.0
      %v2487 = vmax.f32 %v2471, 0.0
      %v2488 = vmax.f32 %v2472, 0.0
      %v2489 = vmax.f32 %v2473, 0.0
      %v2490 = vmax.f32 %v2474, 0.0
      %v2491 = vmax.f32 %v2475, 0.0
      %v2492 = vmax.f32 %v2476, 0.0
      %v2493 = vmax.f32 %v2477, 0.0
      %v2494 = vmax.f32 %v2478, 0.0
      %2495 = vst.msk [vmem:[%s226] sm:$0xff] %vm1608, %v2479
      %2496 = vst.msk [vmem:[%s226 + $0x8] sm:$0xff] %vm1608, %v2480
      %2497 = vst.msk [vmem:[%s226 + $0x10] sm:$0xff] %vm1608, %v2481
      %2498 = vst.msk [vmem:[%s226 + $0x18] sm:$0xff] %vm1608, %v2482
      %2499 = vst.msk [vmem:[%s226 + $0x20] sm:$0xff] %vm1608, %v2483
      %2500 = vst.msk [vmem:[%s226 + $0x28] sm:$0xff] %vm1608, %v2484
      %2501 = vst.msk [vmem:[%s226 + $0x30] sm:$0xff] %vm1608, %v2485
      %2502 = vst.msk [vmem:[%s226 + $0x38] sm:$0xff] %vm1608, %v2486
      %2503 = vst.msk [vmem:[%s226 + $0x40] sm:$0xff] %vm1608, %v2487
      %2504 = vst.msk [vmem:[%s226 + $0x48] sm:$0xff] %vm1608, %v2488
      %2505 = vst.msk [vmem:[%s226 + $0x50] sm:$0xff] %vm1608, %v2489
      %2506 = vst.msk [vmem:[%s226 + $0x58] sm:$0xff] %vm1608, %v2490
      %2507 = vst.msk [vmem:[%s226 + $0x60] sm:$0xff] %vm1608, %v2491
      %2508 = vst.msk [vmem:[%s226 + $0x68] sm:$0xff] %vm1608, %v2492
      %2509 = vst.msk [vmem:[%s226 + $0x70] sm:$0xff] %vm1608, %v2493
      %2510 = vst.msk [vmem:[%s226 + $0x78] sm:$0xff] %vm1608, %v2494
      %v2511 = vld [vmem:[#allocation2 + $0x40] sm:$0xf]
      %v2512 = vld [vmem:[#allocation2 + $0x44] sm:$0xf]
      %v2513 = vld [vmem:[#allocation2 + $0x48] sm:$0xf]
      %v2514 = vld [vmem:[#allocation2 + $0x4c] sm:$0xf]
      %v2515 = vld [vmem:[#allocation2 + $0x50] sm:$0xf]
      %v2516 = vld [vmem:[#allocation2 + $0x54] sm:$0xf]
      %v2517 = vld [vmem:[#allocation2 + $0x58] sm:$0xf]
      %v2518 = vld [vmem:[#allocation2 + $0x5c] sm:$0x7]
      %v2527 = vunpack.c.l.b16 %v2511
      %v2528 = vunpack.c.l.b16 %v2512
      %v2529 = vunpack.c.l.b16 %v2513
      %v2530 = vunpack.c.l.b16 %v2514
      %v2531 = vunpack.c.l.b16 %v2515
      %v2532 = vunpack.c.l.b16 %v2516
      %v2533 = vunpack.c.l.b16 %v2517
      %v2534 = vunpack.c.l.b16 %v2518
      %v2535 = vpack.c.b16 %v2528, %v2527
      %v2536 = vpack.c.b16 %v2530, %v2529
      %v2537 = vpack.c.b16 %v2532, %v2531
      %v2538 = vpack.c.b16 %v2534, %v2533
      %v2540 = vshrl.u32 %v2535, 16
      %v2542 = vshll.u32 %v2535, 16
      %v2544 = vrot.slane %v2542, 1
      %v2545 = vor.u32 %v2540, %v2544
      %v2547 = vshll.u32 %v2536, 16
      %v2549 = vrot.slane %v2547, 1
      %v2550 = vsel %vm1489, %v2545, %v2549
      %v2551 = vshrl.u32 %v2536, 16
      %v2553 = vor.u32 %v2551, %v2549
      %v2555 = vshll.u32 %v2537, 16
      %v2557 = vrot.slane %v2555, 1
      %v2558 = vsel %vm1489, %v2553, %v2557
      %v2559 = vshrl.u32 %v2537, 16
      %v2561 = vor.u32 %v2559, %v2557
      %v2563 = vshll.u32 %v2538, 16
      %v2565 = vrot.slane %v2563, 1
      %v2566 = vsel %vm1489, %v2561, %v2565
      %v2567 = vshrl.u32 %v2538, 16
      %v2569 = vor.u32 %v2567, %v2565
      %2570 = vrot.lane.b32.xlu0 %v2550, 8
      %v2571 = vpop.permute.xlu0 %2570
      %2572 = vrot.lane.b32.xlu0 %v2558, 8
      %v2573 = vpop.permute.xlu0 %2572
      %2574 = vrot.lane.b32.xlu0 %v2566, 8
      %v2575 = vpop.permute.xlu0 %2574
      %2576 = vrot.lane.b32.xlu0 %v2569, 8
      %v2577 = vpop.permute.xlu0 %2576
      %v2578 = vrot.slane %v2535, 1
      %v2579 = vrot.slane %v2536, 1
      %v2580 = vsel %vm1574, %v2578, %v2579
      %v2581 = vrot.slane %v2537, 1
      %v2582 = vsel %vm1574, %v2579, %v2581
      %v2583 = vrot.slane %v2538, 1
      %v2584 = vsel %vm1574, %v2581, %v2583
      %2585 = vrot.lane.b32.xlu0 %v2580, 16
      %v2586 = vpop.permute.xlu0 %2585
      %2587 = vrot.lane.b32.xlu0 %v2582, 16
      %v2588 = vpop.permute.xlu0 %2587
      %2589 = vrot.lane.b32.xlu0 %v2584, 16
      %v2590 = vpop.permute.xlu0 %2589
      %2591 = vrot.lane.b32.xlu0 %v2583, 16
      %v2592 = vpop.permute.xlu0 %2591
      %v2594 = vsel %vm1608, %v2535, %v2571
      %v2596 = vsel %vm1608, %v2536, %v2573
      %v2598 = vsel %vm1608, %v2537, %v2575
      %v2600 = vsel %vm1608, %v2538, %v2577
      %v2602 = vsel %vm1625, %v2594, %v2586
      %v2604 = vsel %vm1625, %v2596, %v2588
      %v2606 = vsel %vm1625, %v2598, %v2590
      %v2608 = vsel %vm1625, %v2600, %v2592
      %v2609 = vld [vmem:[#allocation2 + $0x5c] sm:$0xf]
      %v2610 = vld [vmem:[#allocation2 + $0x60] sm:$0xf]
      %v2611 = vld [vmem:[#allocation2 + $0x64] sm:$0x7]
      %v2615 = vunpack.c.l.b16 %v2609
      %v2616 = vunpack.c.l.b16 %v2610
      %v2617 = vunpack.c.l.b16 %v2611
      %v2618 = vpack.c.b16 %v2615, %v2533
      %v2619 = vpack.c.b16 %v2617, %v2616
      %v2621 = vshll.u32 %v2618, 16
      %v2623 = vrot.slane %v2621, 1
      %v2624 = vsel %vm1489, %v2561, %v2623
      %v2625 = vshrl.u32 %v2618, 16
      %v2627 = vor.u32 %v2625, %v2623
      %v2629 = vshll.u32 %v2619, 16
      %v2631 = vrot.slane %v2629, 1
      %v2632 = vsel %vm1489, %v2627, %v2631
      %v2633 = vshrl.u32 %v2619, 16
      %v2635 = vor.u32 %v2633, %v2631
      %2636 = vrot.lane.b32.xlu0 %v2624, 8
      %v2637 = vpop.permute.xlu0 %2636
      %2638 = vrot.lane.b32.xlu0 %v2632, 8
      %v2639 = vpop.permute.xlu0 %2638
      %2640 = vrot.lane.b32.xlu0 %v2635, 8
      %v2641 = vpop.permute.xlu0 %2640
      %v2642 = vrot.slane %v2618, 1
      %v2643 = vsel %vm1574, %v2581, %v2642
      %v2644 = vrot.slane %v2619, 1
      %v2645 = vsel %vm1574, %v2642, %v2644
      %2646 = vrot.lane.b32.xlu0 %v2643, 16
      %v2647 = vpop.permute.xlu0 %2646
      %2648 = vrot.lane.b32.xlu0 %v2645, 16
      %v2649 = vpop.permute.xlu0 %2648
      %2650 = vrot.lane.b32.xlu0 %v2644, 16
      %v2651 = vpop.permute.xlu0 %2650
      %v2653 = vsel %vm1608, %v2537, %v2637
      %v2655 = vsel %vm1608, %v2618, %v2639
      %v2657 = vsel %vm1608, %v2619, %v2641
      %v2659 = vsel %vm1625, %v2653, %v2647
      %v2661 = vsel %vm1625, %v2655, %v2649
      %v2663 = vsel %vm1625, %v2657, %v2651
      %v2664 = vsel %vm1862, %v2604, 0
      %v2666 = vsel %vm1862, %v2659, 0
      %v2668 = vsel %vm1862, %v2661, 0
      %v2670 = vsel %vm1862, %v2663, 0
      %2672 = vmatprep.subr.bf16.mxu0 0
      %2673 = vmatpush1.bf16.msra.mxu0 0
      %2674 = vmatprep.subr.bf16.mxu0 0
      %2675 = vmatpush1.bf16.msra.mxu0 0
      %2676 = vmatprep.subr.bf16.mxu0 0
      %2677 = vmatpush1.bf16.msra.mxu0 0
      %2678 = vmatprep.subr.bf16.mxu0 0
      %2679 = vmatpush1.bf16.msra.mxu0 0
      %2680 = vmatprep.subr.bf16.mxu0 0
      %2681 = vmatpush1.bf16.msra.mxu0 0
      %2682 = vmatprep.subr.bf16.mxu0 0
      %2683 = vmatpush1.bf16.msra.mxu0 0
      %2684 = vmatprep.subr.bf16.mxu0 0
      %2685 = vmatpush1.bf16.msra.mxu0 %v1881
      %2686 = vmatprep.subr.bf16.mxu0 0
      %2687 = vmatpush1.bf16.msra.mxu0 %v1859
      %2688 = vmatprep.subr.bf16.mxu0 0
      %2689 = vmatpush2.bf16.msra.mxu0 0
      %2690 = vmatprep.subr.bf16.mxu0 0
      %2691 = vmatpush2.bf16.msra.mxu0 0
      %2692 = vmatprep.subr.bf16.mxu0 0
      %2693 = vmatpush2.bf16.msra.mxu0 0
      %2694 = vmatprep.subr.bf16.mxu0 0
      %2695 = vmatpush2.bf16.msra.mxu0 0
      %2696 = vmatprep.subr.bf16.mxu0 0
      %2697 = vmatpush2.bf16.msra.mxu0 0
      %2698 = vmatprep.subr.bf16.mxu0 0
      %2699 = vmatpush2.bf16.msra.mxu0 0
      %2700 = vmatprep.subr.bf16.mxu0 0
      %2701 = vmatpush2.bf16.msra.mxu0 0
      %2702 = vmatprep.subr.bf16.mxu0 0
      %2703 = vmatpush2.bf16.msra.mxu0 0
      %2704 = vmatprep.mubr.bf16.mxu0 0
      %2705 = vmatmul.mubr.bf16.gmra.mxu0 %v2664
      %v2706 = vpop.f32.mrf.mxu0
      %v2707 = vadd.f32 0.0, %v2706
      %v2708 = vpop.f32.mrf.mxu0
      %v2709 = vpop.f32.mrf.mxu0
      %v2710 = vadd.f32 0.0, %v2709
      %v2711 = vpop.f32.mrf.mxu0
      %2712 = vmatprep.mubr.bf16.mxu0 0
      %2713 = vmatmul.mubr.bf16.gmra.mxu0 %v2666
      %v2714 = vpop.f32.mrf.mxu0
      %v2715 = vadd.f32 0.0, %v2714
      %v2716 = vpop.f32.mrf.mxu0
      %v2717 = vpop.f32.mrf.mxu0
      %v2718 = vadd.f32 0.0, %v2717
      %v2719 = vpop.f32.mrf.mxu0
      %2720 = vmatprep.mubr.bf16.mxu0 0
      %2721 = vmatmul.mubr.bf16.gmra.mxu0 %v2668
      %v2722 = vpop.f32.mrf.mxu0
      %v2723 = vadd.f32 0.0, %v2722
      %v2724 = vpop.f32.mrf.mxu0
      %v2725 = vpop.f32.mrf.mxu0
      %v2726 = vadd.f32 0.0, %v2725
      %v2727 = vpop.f32.mrf.mxu0
      %2728 = vmatprep.mubr.bf16.mxu0 0
      %2729 = vmatmul.mubr.bf16.gmra.mxu0 %v2670
      %v2730 = vpop.f32.mrf.mxu0
      %v2731 = vadd.f32 0.0, %v2730
      %v2732 = vpop.f32.mrf.mxu0
      %v2733 = vpop.f32.mrf.mxu0
      %v2734 = vadd.f32 0.0, %v2733
      %v2735 = vpop.f32.mrf.mxu0
      %2736 = vdwg.mxu0
      %v2737 = vsel %vm1862, %v2602, 0
      %v2739 = vsel %vm1862, %v2606, 0
      %v2741 = vsel %vm1862, %v2608, 0
      %2743 = vmatprep.subr.bf16.mxu0 0
      %2744 = vmatpush1.bf16.msra.mxu0 0
      %2745 = vmatprep.subr.bf16.mxu0 0
      %2746 = vmatpush1.bf16.msra.mxu0 0
      %2747 = vmatprep.subr.bf16.mxu0 0
      %2748 = vmatpush1.bf16.msra.mxu0 0
      %2749 = vmatprep.subr.bf16.mxu0 0
      %2750 = vmatpush1.bf16.msra.mxu0 0
      %2751 = vmatprep.subr.bf16.mxu0 0
      %2752 = vmatpush1.bf16.msra.mxu0 0
      %2753 = vmatprep.subr.bf16.mxu0 0
      %2754 = vmatpush1.bf16.msra.mxu0 0
      %2755 = vmatprep.subr.bf16.mxu0 0
      %2756 = vmatpush1.bf16.msra.mxu0 %v2006
      %2757 = vmatprep.subr.bf16.mxu0 0
      %2758 = vmatpush1.bf16.msra.mxu0 %v1986
      %2759 = vmatprep.subr.bf16.mxu0 0
      %2760 = vmatpush2.bf16.msra.mxu0 0
      %2761 = vmatprep.subr.bf16.mxu0 0
      %2762 = vmatpush2.bf16.msra.mxu0 0
      %2763 = vmatprep.subr.bf16.mxu0 0
      %2764 = vmatpush2.bf16.msra.mxu0 0
      %2765 = vmatprep.subr.bf16.mxu0 0
      %2766 = vmatpush2.bf16.msra.mxu0 0
      %2767 = vmatprep.subr.bf16.mxu0 0
      %2768 = vmatpush2.bf16.msra.mxu0 0
      %2769 = vmatprep.subr.bf16.mxu0 0
      %2770 = vmatpush2.bf16.msra.mxu0 0
      %2771 = vmatprep.subr.bf16.mxu0 0
      %2772 = vmatpush2.bf16.msra.mxu0 0
      %2773 = vmatprep.subr.bf16.mxu0 0
      %2774 = vmatpush2.bf16.msra.mxu0 0
      %2775 = vmatprep.mubr.bf16.mxu0 0
      %2776 = vmatmul.mubr.bf16.gmra.mxu0 %v2737
      %v2777 = vpop.f32.mrf.mxu0
      %v2778 = vadd.f32 %v2707, %v2777
      %v2779 = vpop.f32.mrf.mxu0
      %v2780 = vpop.f32.mrf.mxu0
      %v2781 = vadd.f32 %v2710, %v2780
      %v2782 = vpop.f32.mrf.mxu0
      %2783 = vmatprep.mubr.bf16.mxu0 0
      %2784 = vmatmul.mubr.bf16.gmra.mxu0 %v2664
      %v2785 = vpop.f32.mrf.mxu0
      %v2786 = vadd.f32 %v2715, %v2785
      %v2787 = vpop.f32.mrf.mxu0
      %v2788 = vpop.f32.mrf.mxu0
      %v2789 = vadd.f32 %v2718, %v2788
      %v2790 = vpop.f32.mrf.mxu0
      %2791 = vmatprep.mubr.bf16.mxu0 0
      %2792 = vmatmul.mubr.bf16.gmra.mxu0 %v2739
      %v2793 = vpop.f32.mrf.mxu0
      %v2794 = vadd.f32 %v2723, %v2793
      %v2795 = vpop.f32.mrf.mxu0
      %v2796 = vpop.f32.mrf.mxu0
      %v2797 = vadd.f32 %v2726, %v2796
      %v2798 = vpop.f32.mrf.mxu0
      %2799 = vmatprep.mubr.bf16.mxu0 0
      %2800 = vmatmul.mubr.bf16.gmra.mxu0 %v2741
      %v2801 = vpop.f32.mrf.mxu0
      %v2802 = vadd.f32 %v2731, %v2801
      %v2803 = vpop.f32.mrf.mxu0
      %v2804 = vpop.f32.mrf.mxu0
      %v2805 = vadd.f32 %v2734, %v2804
      %v2806 = vpop.f32.mrf.mxu0
      %2807 = vdwg.mxu0
      %v2808 = vld [vmem:[#allocation2 + $0x50] sm:$0xf]
      %v2809 = vld [vmem:[#allocation2 + $0x54] sm:$0xf]
      %v2810 = vld [vmem:[#allocation2 + $0x58] sm:$0xf]
      %v2811 = vld [vmem:[#allocation2 + $0x5c] sm:$0xf]
      %v2812 = vld [vmem:[#allocation2 + $0x60] sm:$0xf]
      %v2813 = vld [vmem:[#allocation2 + $0x64] sm:$0xf]
      %v2814 = vld [vmem:[#allocation2 + $0x68] sm:$0xf]
      %v2815 = vld [vmem:[#allocation2 + $0x6c] sm:$0x7]
      %v2824 = vunpack.c.l.b16 %v2808
      %v2825 = vunpack.c.l.b16 %v2809
      %v2826 = vunpack.c.l.b16 %v2810
      %v2827 = vunpack.c.l.b16 %v2811
      %v2828 = vunpack.c.l.b16 %v2812
      %v2829 = vunpack.c.l.b16 %v2813
      %v2830 = vunpack.c.l.b16 %v2814
      %v2831 = vunpack.c.l.b16 %v2815
      %v2832 = vpack.c.b16 %v2825, %v2824
      %v2833 = vpack.c.b16 %v2827, %v2826
      %v2834 = vpack.c.b16 %v2829, %v2828
      %v2835 = vpack.c.b16 %v2831, %v2830
      %v2837 = vshrl.u32 %v2832, 16
      %v2839 = vshll.u32 %v2832, 16
      %v2841 = vrot.slane %v2839, 1
      %v2842 = vor.u32 %v2837, %v2841
      %v2844 = vshll.u32 %v2833, 16
      %v2846 = vrot.slane %v2844, 1
      %v2847 = vsel %vm1489, %v2842, %v2846
      %v2848 = vshrl.u32 %v2833, 16
      %v2850 = vor.u32 %v2848, %v2846
      %v2852 = vshll.u32 %v2834, 16
      %v2854 = vrot.slane %v2852, 1
      %v2855 = vsel %vm1489, %v2850, %v2854
      %v2856 = vshrl.u32 %v2834, 16
      %v2858 = vor.u32 %v2856, %v2854
      %v2860 = vshll.u32 %v2835, 16
      %v2862 = vrot.slane %v2860, 1
      %v2863 = vsel %vm1489, %v2858, %v2862
      %v2864 = vshrl.u32 %v2835, 16
      %v2866 = vor.u32 %v2864, %v2862
      %2867 = vrot.lane.b32.xlu0 %v2847, 8
      %v2868 = vpop.permute.xlu0 %2867
      %2869 = vrot.lane.b32.xlu0 %v2855, 8
      %v2870 = vpop.permute.xlu0 %2869
      %2871 = vrot.lane.b32.xlu0 %v2863, 8
      %v2872 = vpop.permute.xlu0 %2871
      %2873 = vrot.lane.b32.xlu0 %v2866, 8
      %v2874 = vpop.permute.xlu0 %2873
      %v2875 = vrot.slane %v2832, 1
      %v2876 = vrot.slane %v2833, 1
      %v2877 = vsel %vm1574, %v2875, %v2876
      %v2878 = vrot.slane %v2834, 1
      %v2879 = vsel %vm1574, %v2876, %v2878
      %v2880 = vrot.slane %v2835, 1
      %v2881 = vsel %vm1574, %v2878, %v2880
      %2882 = vrot.lane.b32.xlu0 %v2877, 16
      %v2883 = vpop.permute.xlu0 %2882
      %2884 = vrot.lane.b32.xlu0 %v2879, 16
      %v2885 = vpop.permute.xlu0 %2884
      %2886 = vrot.lane.b32.xlu0 %v2881, 16
      %v2887 = vpop.permute.xlu0 %2886
      %2888 = vrot.lane.b32.xlu0 %v2880, 16
      %v2889 = vpop.permute.xlu0 %2888
      %v2891 = vsel %vm1608, %v2832, %v2868
      %v2893 = vsel %vm1608, %v2833, %v2870
      %v2895 = vsel %vm1608, %v2834, %v2872
      %v2897 = vsel %vm1608, %v2835, %v2874
      %v2899 = vsel %vm1625, %v2891, %v2883
      %v2901 = vsel %vm1625, %v2893, %v2885
      %v2903 = vsel %vm1625, %v2895, %v2887
      %v2905 = vsel %vm1625, %v2897, %v2889
      %v2906 = vsel %vm1862, %v2899, 0
      %v2908 = vsel %vm1862, %v2901, 0
      %v2910 = vsel %vm1862, %v2903, 0
      %v2912 = vsel %vm1862, %v2905, 0
      %2914 = vmatprep.subr.bf16.mxu0 0
      %2915 = vmatpush1.bf16.msra.mxu0 0
      %2916 = vmatprep.subr.bf16.mxu0 0
      %2917 = vmatpush1.bf16.msra.mxu0 0
      %2918 = vmatprep.subr.bf16.mxu0 0
      %2919 = vmatpush1.bf16.msra.mxu0 0
      %2920 = vmatprep.subr.bf16.mxu0 0
      %2921 = vmatpush1.bf16.msra.mxu0 0
      %2922 = vmatprep.subr.bf16.mxu0 0
      %2923 = vmatpush1.bf16.msra.mxu0 0
      %2924 = vmatprep.subr.bf16.mxu0 0
      %2925 = vmatpush1.bf16.msra.mxu0 0
      %2926 = vmatprep.subr.bf16.mxu0 0
      %2927 = vmatpush1.bf16.msra.mxu0 %v2342
      %2928 = vmatprep.subr.bf16.mxu0 0
      %2929 = vmatpush1.bf16.msra.mxu0 %v2322
      %2930 = vmatprep.subr.bf16.mxu0 0
      %2931 = vmatpush2.bf16.msra.mxu0 0
      %2932 = vmatprep.subr.bf16.mxu0 0
      %2933 = vmatpush2.bf16.msra.mxu0 0
      %2934 = vmatprep.subr.bf16.mxu0 0
      %2935 = vmatpush2.bf16.msra.mxu0 0
      %2936 = vmatprep.subr.bf16.mxu0 0
      %2937 = vmatpush2.bf16.msra.mxu0 0
      %2938 = vmatprep.subr.bf16.mxu0 0
      %2939 = vmatpush2.bf16.msra.mxu0 0
      %2940 = vmatprep.subr.bf16.mxu0 0
      %2941 = vmatpush2.bf16.msra.mxu0 0
      %2942 = vmatprep.subr.bf16.mxu0 0
      %2943 = vmatpush2.bf16.msra.mxu0 0
      %2944 = vmatprep.subr.bf16.mxu0 0
      %2945 = vmatpush2.bf16.msra.mxu0 0
      %2946 = vmatprep.mubr.bf16.mxu0 0
      %2947 = vmatmul.mubr.bf16.gmra.mxu0 %v2906
      %v2948 = vpop.f32.mrf.mxu0
      %v2949 = vadd.f32 0.0, %v2948
      %v2950 = vpop.f32.mrf.mxu0
      %v2951 = vpop.f32.mrf.mxu0
      %v2952 = vadd.f32 0.0, %v2951
      %v2953 = vpop.f32.mrf.mxu0
      %2954 = vmatprep.mubr.bf16.mxu0 0
      %2955 = vmatmul.mubr.bf16.gmra.mxu0 %v2908
      %v2956 = vpop.f32.mrf.mxu0
      %v2957 = vadd.f32 0.0, %v2956
      %v2958 = vpop.f32.mrf.mxu0
      %v2959 = vpop.f32.mrf.mxu0
      %v2960 = vadd.f32 0.0, %v2959
      %v2961 = vpop.f32.mrf.mxu0
      %2962 = vmatprep.mubr.bf16.mxu0 0
      %2963 = vmatmul.mubr.bf16.gmra.mxu0 %v2910
      %v2964 = vpop.f32.mrf.mxu0
      %v2965 = vadd.f32 0.0, %v2964
      %v2966 = vpop.f32.mrf.mxu0
      %v2967 = vpop.f32.mrf.mxu0
      %v2968 = vadd.f32 0.0, %v2967
      %v2969 = vpop.f32.mrf.mxu0
      %2970 = vmatprep.mubr.bf16.mxu0 0
      %2971 = vmatmul.mubr.bf16.gmra.mxu0 %v2912
      %v2972 = vpop.f32.mrf.mxu0
      %v2973 = vadd.f32 0.0, %v2972
      %v2974 = vpop.f32.mrf.mxu0
      %v2975 = vpop.f32.mrf.mxu0
      %v2976 = vadd.f32 0.0, %v2975
      %v2977 = vpop.f32.mrf.mxu0
      %2978 = vdwg.mxu0
      %v2979 = vadd.f32 %v2778, %v2949
      %v2980 = vadd.f32 %v2781, %v2952
      %v2981 = vadd.f32 %v2786, %v2957
      %v2982 = vadd.f32 %v2789, %v2960
      %v2983 = vadd.f32 %v2794, %v2965
      %v2984 = vadd.f32 %v2797, %v2968
      %v2985 = vadd.f32 %v2802, %v2973
      %v2986 = vadd.f32 %v2805, %v2976
      %v2987 = vadd.f32 %v2979, %v2461
      %v2988 = vadd.f32 %v2980, %v2461
      %v2989 = vadd.f32 %v2981, %v2461
      %v2990 = vadd.f32 %v2982, %v2461
      %v2991 = vadd.f32 %v2983, %v2461
      %v2992 = vadd.f32 %v2984, %v2461
      %v2993 = vadd.f32 %v2985, %v2461
      %v2994 = vadd.f32 %v2986, %v2461
      %v2995 = vmax.f32 %v2987, 0.0
      %v2996 = vmax.f32 %v2988, 0.0
      %v2997 = vmax.f32 %v2989, 0.0
      %v2998 = vmax.f32 %v2990, 0.0
      %v2999 = vmax.f32 %v2991, 0.0
      %v3000 = vmax.f32 %v2992, 0.0
      %v3001 = vmax.f32 %v2993, 0.0
      %v3002 = vmax.f32 %v2994, 0.0
      %3003 = vst.msk [vmem:[%s226 + $0x80] sm:$0xff] %vm1608, %v2995
      %3004 = vst.msk [vmem:[%s226 + $0x88] sm:$0xff] %vm1608, %v2996
      %3005 = vst.msk [vmem:[%s226 + $0x90] sm:$0xff] %vm1608, %v2997
      %3006 = vst.msk [vmem:[%s226 + $0x98] sm:$0xff] %vm1608, %v2998
      %3007 = vst.msk [vmem:[%s226 + $0xa0] sm:$0xff] %vm1608, %v2999
      %3008 = vst.msk [vmem:[%s226 + $0xa8] sm:$0xff] %vm1608, %v3000
      %3009 = vst.msk [vmem:[%s226 + $0xb0] sm:$0xff] %vm1608, %v3001
      %3010 = vst.msk [vmem:[%s226 + $0xb8] sm:$0xf] %vm935, %v3002
      %s3011 = smul.u32 32, %s16
      %p3012 = scmp.lt.s32.totalorder %s3011, 63
      %s3013 = scalar_select %p3012, %s3011, 63
      %s3014 = smul.addr %s3013, 8
      %s3015 = scalar_lea.vmem %s5, %s3014
      // Predicated region
      $region41: #{tpu_custom_call.1} parent=39 // pred_check
        %p3016 = pneg %p144
      $region42: #{tpu_custom_call.1} parent=39 // pred_check_branch
        %3018 = sbr.rel (%p3016) target = $region44
      $region43: #{tpu_custom_call.1} parent=39 // pred_region
        %s3019 = smul.u32 32, %s16
      $region44: #{tpu_custom_call.1} parent=39 // pred_fallthru
        _
    $region40: #{tpu_custom_call.1} parent=5 // pred_fallthru
      _
    %p3020 = scmp.le.s32.totalorder 2, %s11
    // Predicated region
    $region45: #{tpu_custom_call.1} parent=5 // pred_check
      %p3021 = pneg %p3020
    $region46: #{tpu_custom_call.1} parent=5 // pred_check_branch
      %3023 = sbr.rel (%p3021) target = $region48
    $region47: #{tpu_custom_call.1} parent=5 // pred_region
      %s3024 = ssub.s32 %s11, 2
      // Predicated region
      $region49: #{tpu_custom_call.1} parent=47 // pred_check
        %p3025 = pneg %p150
      $region50: #{tpu_custom_call.1} parent=47 // pred_check_branch
        %3027 = sbr.rel (%p3025) target = $region52
      $region51: #{tpu_custom_call.1} parent=47 // pred_region
        %s3028 = smul.u32 32, %s17
        %p3029 = scmp.lt.s32.totalorder %s3028, 63
        %s3030 = scalar_select %p3029, %s3028, 63
        %s3031 = smul.addr %s3030, 8
        %s3032 = scalar_lea.vmem %s5, %s3031
      $region52: #{tpu_custom_call.1} parent=47 // pred_fallthru
        _
    $region48: #{tpu_custom_call.1} parent=5 // pred_fallthru
      _
  $region6: #{tpu_custom_call.1} parent=0 // loop_footer
    %s15 = sadd.s32 1, %s11
  $region7: #{tpu_custom_call.1} parent=0 // loop_footer_branch
    %10 = sbr.rel target = $region3
  $region8: #{tpu_custom_call.1} parent=0 // loop_exit
    _

</llo_original>
